<compile_context>
chip_gen: v5e
topology: v5e:2x2
jax: 0.10.0
libtpu: 0.0.40
codegen_flags: <defaults>
</compile_context>

<pallas_src>
import jax
import jax.numpy as jnp
from jax.experimental import pallas as pl
from jax.experimental.pallas import tpu as pltpu


# ----------------------------------------------------------------------------
# Kernel 1/2: conv-as-im2col matmul + bias + ReLU (single full-array VMEM block).
# ----------------------------------------------------------------------------
def _matmul_bias_relu_kernel(x_ref, w_ref, b_ref, o_ref):
    # bf16 operands -> MXU, f32 accumulate; bias + ReLU in f32 on the VPU.
    acc = jnp.dot(x_ref[...], w_ref[...], preferred_element_type=jnp.float32)
    acc = jnp.maximum(acc + b_ref[...], 0.0)
    o_ref[...] = acc.astype(o_ref.dtype)


def conv_matmul(patches, w_mat, b, out_dtype):
    """patches: (M,K) bf16, w_mat: (K,N) bf16, b: (1,N) f32 -> (M,N) out_dtype."""
    M, K = patches.shape
    K2, N = w_mat.shape
    assert K == K2, (K, K2)
    vmem = pl.BlockSpec(memory_space=pltpu.MemorySpace.VMEM)
    return pl.pallas_call(
        _matmul_bias_relu_kernel,
        out_shape=jax.ShapeDtypeStruct((M, N), out_dtype),
        in_specs=[vmem, vmem, vmem],
        out_specs=vmem,
    )(patches, w_mat, b)


# ----------------------------------------------------------------------------
# Kernel 3: fused TN + FC + final MLP.  All weights (~0.3 MB) and every
# intermediate live in VMEM / vregs; only (B,2) is written back to HBM.
# ----------------------------------------------------------------------------
def _tail_kernel(x_ref, wtn_ref, wfc_ref, bfc_ref,
                 w1a_ref, w1b_ref, b1_ref,
                 w2_ref, b2_ref, w3_ref, b3_ref, o_ref):
    f32, bf16 = jnp.float32, jnp.bfloat16
    x = x_ref[...]                                                 # (B,1536) bf16
    # TN branch: the three Tucker mode contractions pre-composed into one matrix.
    tn = jnp.dot(x, wtn_ref[...], preferred_element_type=f32)      # (B,64) f32
    # FC branch: Linear(1536,64) + ReLU.
    fc = jnp.dot(x, wfc_ref[...], preferred_element_type=f32) + bfc_ref[...]
    fc = jnp.maximum(fc, 0.0)
    # final MLP, concat-free: z1 = [tn|fc] @ f1_w + b1.
    z1 = (jnp.dot(tn.astype(bf16), w1a_ref[...], preferred_element_type=f32)
          + jnp.dot(fc.astype(bf16), w1b_ref[...], preferred_element_type=f32)
          + b1_ref[...])
    z1 = jnp.maximum(z1, 0.0)
    z2 = jnp.dot(z1.astype(bf16), w2_ref[...], preferred_element_type=f32) + b2_ref[...]
    z2 = jnp.maximum(z2, 0.0)
    out = jnp.dot(z2.astype(bf16), w3_ref[...], preferred_element_type=f32) + b3_ref[...]
    o_ref[...] = out.astype(o_ref.dtype)


def tail_forward(x_feat, p):
    B = x_feat.shape[0]
    vmem = pl.BlockSpec(memory_space=pltpu.MemorySpace.VMEM)
    args = (x_feat,
            p["tn_w"],
            p["fc_w"], p["fc_b"],
            p["f1_w_tn"], p["f1_w_fc"], p["f1_b"],
            p["f2_w"], p["f2_b"],
            p["f3_w"], p["f3_b"])
    return pl.pallas_call(
        _tail_kernel,
        out_shape=jax.ShapeDtypeStruct((B, 2), jnp.float32),
        in_specs=[vmem] * len(args),
        out_specs=vmem,
    )(*args)


# ----------------------------------------------------------------------------
# Glue: NHWC im2col (pure static slicing / stacking — no NCHW round trips).
# ----------------------------------------------------------------------------
def im2col_nhwc(x, kh, kw, stride, pad):
    """x: (B,H,W,C) -> (B*Ho*Wo, kh*kw*C), column order (kh, kw, Cin)."""
    B, H, W, C = x.shape
    xp = jnp.pad(x, ((0, 0), (pad, pad), (pad, pad), (0, 0)))
    Ho = (H + 2 * pad - kh) // stride + 1
    Wo = (W + 2 * pad - kw) // stride + 1
    cols = []
    for i in range(kh):
        for j in range(kw):
            cols.append(xp[:, i:i + stride * Ho:stride, j:j + stride * Wo:stride, :])
    col = jnp.stack(cols, axis=3)                    # (B, Ho, Wo, kh*kw, C)
    return col.reshape(B * Ho * Wo, kh * kw * C), Ho, Wo


def conv2d_relu_nhwc(x, w_mat, b, kh, kw, stride, pad, k_pad):
    """NHWC conv + ReLU via im2col + Pallas matmul; returns NHWC bf16."""
    B = x.shape[0]
    patches, Ho, Wo = im2col_nhwc(x, kh, kw, stride, pad)
    if k_pad:
        patches = jnp.pad(patches, ((0, 0), (0, k_pad)))   # align K (27 -> 32)
    patches = patches.astype(jnp.bfloat16)
    N = w_mat.shape[1]
    y = conv_matmul(patches, w_mat, b, jnp.bfloat16)        # (B*Ho*Wo, N)
    return y.reshape(B, Ho, Wo, N)                          # free contiguous reshape


# ----------------------------------------------------------------------------
# Parameters (deterministic init; weights pre-transposed / pre-cast once here).
# ----------------------------------------------------------------------------
def init_params(key):
    ks = jax.random.split(key, 16)
    bf16 = jnp.bfloat16

    def w(k, shape, fan_in):
        return jax.random.normal(k, shape, jnp.float32) / jnp.sqrt(float(fan_in))

    p = {}
    # cnn: 3 -> 16 -> 24, two stride-2 3x3 convs (32x32 -> 16x16 -> 8x8)
    conv1_w = w(ks[0], (16, 3, 3, 3), 3 * 9)          # PyTorch (Cout,Cin,kH,kW)
    conv2_w = w(ks[1], (24, 16, 3, 3), 16 * 9)
    w1 = conv1_w.transpose(2, 3, 1, 0).reshape(27, 16)          # rows = (kh,kw,cin)
    p["conv1_w"] = jnp.pad(w1, ((0, 5), (0, 0))).astype(bf16)   # K 27 -> 32
    p["conv1_b"] = jnp.zeros((1, 16), jnp.float32)
    p["conv2_w"] = conv2_w.transpose(2, 3, 1, 0).reshape(144, 24).astype(bf16)
    p["conv2_b"] = jnp.zeros((1, 24), jnp.float32)

    # TN: Tucker factors 24->4 (channel), 8->4 (H), 8->4 (W), composed offline
    # into one (1536,64) matrix with rows in NHWC flatten order (h,w,c) and
    # columns in (p,q,r) order — identical to the sequential mode contractions.
    u1 = w(ks[2], (24, 4), 24)
    u2 = w(ks[3], (8, 4), 8)
    u3 = w(ks[4], (8, 4), 8)
    tn_w = jnp.einsum("hq,wr,cp->hwcpqr", u2, u3, u1).reshape(1536, 64)
    p["tn_w"] = tn_w.astype(bf16)

    # FC: Linear(1536,64)+ReLU on the NCHW flatten; permute rows to NHWC order.
    fc_w = w(ks[5], (1536, 64), 1536)                           # rows = (c,h,w)
    p["fc_w"] = (fc_w.reshape(24, 8, 8, 64).transpose(1, 2, 0, 3)
                 .reshape(1536, 64).astype(bf16))               # rows = (h,w,c)
    p["fc_b"] = jnp.zeros((1, 64), jnp.float32)

    # final: 128 -> 64 -> ReLU -> 64 -> 32 -> ReLU -> 32 -> 2
    f1_w = w(ks[6], (128, 64), 128)
    p["f1_w_tn"] = f1_w[:64].astype(bf16)      # rows hitting tn_x (concat order)
    p["f1_w_fc"] = f1_w[64:].astype(bf16)      # rows hitting fc_x
    p["f1_b"] = jnp.zeros((1, 64), jnp.float32)
    p["f2_w"] = w(ks[7], (64, 32), 64).astype(bf16)
    p["f2_b"] = jnp.zeros((1, 32), jnp.float32)
    p["f3_w"] = w(ks[8], (32, 2), 32).astype(bf16)
    p["f3_b"] = jnp.zeros((1, 2), jnp.float32)
    return p


# ----------------------------------------------------------------------------
# Forward pass: 3 pallas_calls total (conv1, conv2, fused TN+FC+final).
# ----------------------------------------------------------------------------
def forward(p, img):
    B = img.shape[0]
    x = img.transpose(0, 2, 3, 1)                                        # NCHW -> NHWC once
    x = conv2d_relu_nhwc(x, p["conv1_w"], p["conv1_b"], 3, 3, 2, 1, 5)   # (B,16,16,16) bf16
    x = conv2d_relu_nhwc(x, p["conv2_w"], p["conv2_b"], 3, 3, 2, 1, 0)   # (B,8,8,24)  bf16
    x_feat = x.reshape(B, 8 * 8 * 24)     # free flatten, NHWC order, already bf16
    return tail_forward(x_feat, p)        # (B, 2) f32


if __name__ == "__main__":
    key = jax.random.PRNGKey(0)
    k_param, k_img = jax.random.split(key)
    params = init_params(k_param)

    batch = 2
    img = jax.random.normal(k_img, (batch, 3, 32, 32), jnp.float32)      # NCHW

    out = jax.jit(forward)(params, img)
    out = jax.block_until_ready(out)
    assert out.shape == (batch, 2), out.shape
    assert jnp.all(jnp.isfinite(out))
    print("KERNEL_OK")
</pallas_src>

<mosaic_0001>
module attributes {stable_mosaic.version = 11 : i64} {
  func.func @_matmul_bias_relu_kernel(%arg0: memref<512x32xbf16, #tpu.memory_space<vmem>>, %arg1: memref<32x16xbf16, #tpu.memory_space<vmem>>, %arg2: memref<1x16xf32, #tpu.memory_space<vmem>>, %arg3: memref<512x16xbf16, #tpu.memory_space<vmem>>) attributes {dimension_semantics = [], scalar_prefetch = 0 : i64, scratch_operands = 0 : i64, tpu.core_type = #tpu.core_type<tc>} {
    %c0 = arith.constant 0 : index
    %c0_0 = arith.constant 0 : index
    %0 = vector.load %arg0[%c0, %c0_0] : memref<512x32xbf16, #tpu.memory_space<vmem>>, vector<512x32xbf16>
    %c0_1 = arith.constant 0 : index
    %c0_2 = arith.constant 0 : index
    %1 = vector.load %arg1[%c0_1, %c0_2] : memref<32x16xbf16, #tpu.memory_space<vmem>>, vector<32x16xbf16>
    %cst = arith.constant dense<0.000000e+00> : vector<512x16xf32>
    %2 = tpu.matmul %0, %1, %cst {dimension_numbers = #tpu.dot_dimension_numbers<[1], [0], [0], [1], [0, 0, 1, 1], [], []>} : vector<512x32xbf16>, vector<32x16xbf16>, vector<512x16xf32> -> vector<512x16xf32>
    %c0_3 = arith.constant 0 : index
    %c0_4 = arith.constant 0 : index
    %3 = vector.load %arg2[%c0_3, %c0_4] : memref<1x16xf32, #tpu.memory_space<vmem>>, vector<1x16xf32>
    %4 = vector.broadcast %3 : vector<1x16xf32> to vector<512x16xf32>
    %5 = arith.addf %2, %4 : vector<512x16xf32>
    %cst_5 = arith.constant 0.000000e+00 : f32
    %6 = vector.broadcast %cst_5 : f32 to vector<512x16xf32>
    %7 = arith.maximumf %5, %6 : vector<512x16xf32>
    %8 = arith.truncf %7 : vector<512x16xf32> to vector<512x16xbf16>
    %c0_6 = arith.constant 0 : index
    %c0_7 = arith.constant 0 : index
    %9 = vector.load %arg3[%c0_6, %c0_7] : memref<512x16xbf16, #tpu.memory_space<vmem>>, vector<512x16xbf16>
    tpu.vector_store %arg3[%c0_6, %c0_7], %8 {strides = array<i32>} : memref<512x16xbf16, #tpu.memory_space<vmem>>, vector<512x16xbf16>,
    return
  }
}

module attributes {stable_mosaic.version = 11 : i64} {
  func.func @_matmul_bias_relu_kernel(%arg0: memref<128x144xbf16, #tpu.memory_space<vmem>>, %arg1: memref<144x24xbf16, #tpu.memory_space<vmem>>, %arg2: memref<1x24xf32, #tpu.memory_space<vmem>>, %arg3: memref<128x24xbf16, #tpu.memory_space<vmem>>) attributes {dimension_semantics = [], scalar_prefetch = 0 : i64, scratch_operands = 0 : i64, tpu.core_type = #tpu.core_type<tc>} {
    %c0 = arith.constant 0 : index
    %c0_0 = arith.constant 0 : index
    %0 = vector.load %arg0[%c0, %c0_0] : memref<128x144xbf16, #tpu.memory_space<vmem>>, vector<128x144xbf16>
    %c0_1 = arith.constant 0 : index
    %c0_2 = arith.constant 0 : index
    %1 = vector.load %arg1[%c0_1, %c0_2] : memref<144x24xbf16, #tpu.memory_space<vmem>>, vector<144x24xbf16>
    %cst = arith.constant dense<0.000000e+00> : vector<128x24xf32>
    %2 = tpu.matmul %0, %1, %cst {dimension_numbers = #tpu.dot_dimension_numbers<[1], [0], [0], [1], [0, 0, 1, 1], [], []>} : vector<128x144xbf16>, vector<144x24xbf16>, vector<128x24xf32> -> vector<128x24xf32>
    %c0_3 = arith.constant 0 : index
    %c0_4 = arith.constant 0 : index
    %3 = vector.load %arg2[%c0_3, %c0_4] : memref<1x24xf32, #tpu.memory_space<vmem>>, vector<1x24xf32>
    %4 = vector.broadcast %3 : vector<1x24xf32> to vector<128x24xf32>
    %5 = arith.addf %2, %4 : vector<128x24xf32>
    %cst_5 = arith.constant 0.000000e+00 : f32
    %6 = vector.broadcast %cst_5 : f32 to vector<128x24xf32>
    %7 = arith.maximumf %5, %6 : vector<128x24xf32>
    %8 = arith.truncf %7 : vector<128x24xf32> to vector<128x24xbf16>
    %c0_6 = arith.constant 0 : index
    %c0_7 = arith.constant 0 : index
    %9 = vector.load %arg3[%c0_6, %c0_7] : memref<128x24xbf16, #tpu.memory_space<vmem>>, vector<128x24xbf16>
    tpu.vector_store %arg3[%c0_6, %c0_7], %8 {strides = array<i32>} : memref<128x24xbf16, #tpu.memory_space<vmem>>, vector<128x24xbf16>,
    return
  }
}

module attributes {stable_mosaic.version = 11 : i64} {
  func.func @_tail_kernel(%arg0: memref<2x1536xbf16, #tpu.memory_space<vmem>>, %arg1: memref<1536x64xbf16, #tpu.memory_space<vmem>>, %arg2: memref<1536x64xbf16, #tpu.memory_space<vmem>>, %arg3: memref<1x64xf32, #tpu.memory_space<vmem>>, %arg4: memref<64x64xbf16, #tpu.memory_space<vmem>>, %arg5: memref<64x64xbf16, #tpu.memory_space<vmem>>, %arg6: memref<1x64xf32, #tpu.memory_space<vmem>>, %arg7: memref<64x32xbf16, #tpu.memory_space<vmem>>, %arg8: memref<1x32xf32, #tpu.memory_space<vmem>>, %arg9: memref<32x2xbf16, #tpu.memory_space<vmem>>, %arg10: memref<1x2xf32, #tpu.memory_space<vmem>>, %arg11: memref<2x2xf32, #tpu.memory_space<vmem>>) attributes {dimension_semantics = [], scalar_prefetch = 0 : i64, scratch_operands = 0 : i64, tpu.core_type = #tpu.core_type<tc>} {
    %c0 = arith.constant 0 : index
    %c0_0 = arith.constant 0 : index
    %0 = vector.load %arg0[%c0, %c0_0] : memref<2x1536xbf16, #tpu.memory_space<vmem>>, vector<2x1536xbf16>
    %c0_1 = arith.constant 0 : index
    %c0_2 = arith.constant 0 : index
    %1 = vector.load %arg1[%c0_1, %c0_2] : memref<1536x64xbf16, #tpu.memory_space<vmem>>, vector<1536x64xbf16>
    %cst = arith.constant dense<0.000000e+00> : vector<2x64xf32>
    %2 = tpu.matmul %0, %1, %cst {dimension_numbers = #tpu.dot_dimension_numbers<[1], [0], [0], [1], [0, 0, 1, 1], [], []>} : vector<2x1536xbf16>, vector<1536x64xbf16>, vector<2x64xf32> -> vector<2x64xf32>
    %c0_3 = arith.constant 0 : index
    %c0_4 = arith.constant 0 : index
    %3 = vector.load %arg2[%c0_3, %c0_4] : memref<1536x64xbf16, #tpu.memory_space<vmem>>, vector<1536x64xbf16>
    %cst_5 = arith.constant dense<0.000000e+00> : vector<2x64xf32>
    %4 = tpu.matmul %0, %3, %cst_5 {dimension_numbers = #tpu.dot_dimension_numbers<[1], [0], [0], [1], [0, 0, 1, 1], [], []>} : vector<2x1536xbf16>, vector<1536x64xbf16>, vector<2x64xf32> -> vector<2x64xf32>
    %c0_6 = arith.constant 0 : index
    %c0_7 = arith.constant 0 : index
    %5 = vector.load %arg3[%c0_6, %c0_7] : memref<1x64xf32, #tpu.memory_space<vmem>>, vector<1x64xf32>
    %6 = vector.broadcast %5 : vector<1x64xf32> to vector<2x64xf32>
    %7 = arith.addf %4, %6 : vector<2x64xf32>
    %cst_8 = arith.constant 0.000000e+00 : f32
    %8 = vector.broadcast %cst_8 : f32 to vector<2x64xf32>
    %9 = arith.maximumf %7, %8 : vector<2x64xf32>
    %10 = arith.truncf %2 : vector<2x64xf32> to vector<2x64xbf16>
    %c0_9 = arith.constant 0 : index
    %c0_10 = arith.constant 0 : index
    %11 = vector.load %arg4[%c0_9, %c0_10] : memref<64x64xbf16, #tpu.memory_space<vmem>>, vector<64x64xbf16>
    %cst_11 = arith.constant dense<0.000000e+00> : vector<2x64xf32>
    %12 = tpu.matmul %10, %11, %cst_11 {dimension_numbers = #tpu.dot_dimension_numbers<[1], [0], [0], [1], [0, 0, 1, 1], [], []>} : vector<2x64xbf16>, vector<64x64xbf16>, vector<2x64xf32> -> vector<2x64xf32>
    %13 = arith.truncf %9 : vector<2x64xf32> to vector<2x64xbf16>
    %c0_12 = arith.constant 0 : index
    %c0_13 = arith.constant 0 : index
    %14 = vector.load %arg5[%c0_12, %c0_13] : memref<64x64xbf16, #tpu.memory_space<vmem>>, vector<64x64xbf16>
    %cst_14 = arith.constant dense<0.000000e+00> : vector<2x64xf32>
    %15 = tpu.matmul %13, %14, %cst_14 {dimension_numbers = #tpu.dot_dimension_numbers<[1], [0], [0], [1], [0, 0, 1, 1], [], []>} : vector<2x64xbf16>, vector<64x64xbf16>, vector<2x64xf32> -> vector<2x64xf32>
    %16 = arith.addf %12, %15 : vector<2x64xf32>
    %c0_15 = arith.constant 0 : index
    %c0_16 = arith.constant 0 : index
    %17 = vector.load %arg6[%c0_15, %c0_16] : memref<1x64xf32, #tpu.memory_space<vmem>>, vector<1x64xf32>
    %18 = vector.broadcast %17 : vector<1x64xf32> to vector<2x64xf32>
    %19 = arith.addf %16, %18 : vector<2x64xf32>
    %cst_17 = arith.constant 0.000000e+00 : f32
    %20 = vector.broadcast %cst_17 : f32 to vector<2x64xf32>
    %21 = arith.maximumf %19, %20 : vector<2x64xf32>
    %22 = arith.truncf %21 : vector<2x64xf32> to vector<2x64xbf16>
    %c0_18 = arith.constant 0 : index
    %c0_19 = arith.constant 0 : index
    %23 = vector.load %arg7[%c0_18, %c0_19] : memref<64x32xbf16, #tpu.memory_space<vmem>>, vector<64x32xbf16>
    %cst_20 = arith.constant dense<0.000000e+00> : vector<2x32xf32>
    %24 = tpu.matmul %22, %23, %cst_20 {dimension_numbers = #tpu.dot_dimension_numbers<[1], [0], [0], [1], [0, 0, 1, 1], [], []>} : vector<2x64xbf16>, vector<64x32xbf16>, vector<2x32xf32> -> vector<2x32xf32>
    %c0_21 = arith.constant 0 : index
    %c0_22 = arith.constant 0 : index
    %25 = vector.load %arg8[%c0_21, %c0_22] : memref<1x32xf32, #tpu.memory_space<vmem>>, vector<1x32xf32>
    %26 = vector.broadcast %25 : vector<1x32xf32> to vector<2x32xf32>
    %27 = arith.addf %24, %26 : vector<2x32xf32>
    %cst_23 = arith.constant 0.000000e+00 : f32
    %28 = vector.broadcast %cst_23 : f32 to vector<2x32xf32>
    %29 = arith.maximumf %27, %28 : vector<2x32xf32>
    %30 = arith.truncf %29 : vector<2x32xf32> to vector<2x32xbf16>
    %c0_24 = arith.constant 0 : index
    %c0_25 = arith.constant 0 : index
    %31 = vector.load %arg9[%c0_24, %c0_25] : memref<32x2xbf16, #tpu.memory_space<vmem>>, vector<32x2xbf16>
    %cst_26 = arith.constant dense<0.000000e+00> : vector<2x2xf32>
    %32 = tpu.matmul %30, %31, %cst_26 {dimension_numbers = #tpu.dot_dimension_numbers<[1], [0], [0], [1], [0, 0, 1, 1], [], []>} : vector<2x32xbf16>, vector<32x2xbf16>, vector<2x2xf32> -> vector<2x2xf32>
    %c0_27 = arith.constant 0 : index
    %c0_28 = arith.constant 0 : index
    %33 = vector.load %arg10[%c0_27, %c0_28] : memref<1x2xf32, #tpu.memory_space<vmem>>, vector<1x2xf32>
    %34 = vector.broadcast %33 : vector<1x2xf32> to vector<2x2xf32>
    %35 = arith.addf %32, %34 : vector<2x2xf32>
    %c0_29 = arith.constant 0 : index
    %c0_30 = arith.constant 0 : index
    %36 = vector.load %arg11[%c0_29, %c0_30] : memref<2x2xf32, #tpu.memory_space<vmem>>, vector<2x2xf32>
    tpu.vector_store %arg11[%c0_29, %c0_30], %35 {strides = array<i32>} : memref<2x2xf32, #tpu.memory_space<vmem>>, vector<2x2xf32>,
    return
  }
}

</mosaic_0001>

<llo_original>
// kernel: forward.3
$region0: #{forward.3}
  #allocation0 [shape = 'u32[]', space=smem, size = 0x4, offset = 0x4, fixed_abs, tag = 'smem constant byte address 0x4 - core index']
  #allocation1 [shape = 'u32[72,128]{1,0:T(1,128)}', space=vmem, size = 0x9000, scoped, tag = 'internal scratch']
  %s0 = inlined_call_operand.vmem [shape: bf16[512,32], index: 0, kind: input, shape index: {}]
  %s1 = inlined_call_operand.vmem [shape: bf16[32,16], index: 1, kind: input, shape index: {}]
  %s2 = inlined_call_operand.vmem [shape: f32[1,16], index: 2, kind: input, shape index: {}]
  %s3 = inlined_call_operand.vmem [shape: bf16[512,16], index: 3, kind: output, shape index: {}]
  %s4 = sld [smem:[#allocation0]]
  $region22: #{forward.3} parent=0
    _
  %s6 = ssub.s32 1, %s4
  %s7 = scalar_select 0, %s6, %s4
  // Predicated region
  $region2: #{forward.3} parent=0 // pred_check
    _
  $region3: #{forward.3} parent=0 // pred_check_branch
    %9 = sbr.rel (0) target = $region5
  $region4: #{forward.3} parent=0 // pred_region
    _
  $region5: #{forward.3} parent=0 // pred_fallthru
    _
  // Predicated region
  $region6: #{forward.3} parent=0 // pred_check
    _
  $region7: #{forward.3} parent=0 // pred_check_branch
    %11 = sbr.rel (0) target = $region9
  $region8: #{forward.3} parent=0 // pred_region
    _
  $region9: #{forward.3} parent=0 // pred_fallthru
    _
  // Predicated region
  $region10: #{forward.3} parent=0 // pred_check
    _
  $region11: #{forward.3} parent=0 // pred_check_branch
    %13 = sbr.rel (0) target = $region13
  $region12: #{forward.3} parent=0 // pred_region
    _
  $region13: #{forward.3} parent=0 // pred_fallthru
    _
  %v15 = vld [vmem:[%s0] sm:$0xf]
  %v16 = vld [vmem:[%s0 + $0x4] sm:$0xf]
  %v17 = vld [vmem:[%s0 + $0x8] sm:$0xf]
  %v18 = vld [vmem:[%s0 + $0xc] sm:$0xf]
  %v19 = vld [vmem:[%s0 + $0x10] sm:$0xf]
  %v20 = vld [vmem:[%s0 + $0x14] sm:$0xf]
  %v21 = vld [vmem:[%s0 + $0x18] sm:$0xf]
  %v22 = vld [vmem:[%s0 + $0x1c] sm:$0xf]
  %v23 = vld [vmem:[%s0 + $0x20] sm:$0xf]
  %v24 = vld [vmem:[%s0 + $0x24] sm:$0xf]
  %v25 = vld [vmem:[%s0 + $0x28] sm:$0xf]
  %v26 = vld [vmem:[%s0 + $0x2c] sm:$0xf]
  %v27 = vld [vmem:[%s0 + $0x30] sm:$0xf]
  %v28 = vld [vmem:[%s0 + $0x34] sm:$0xf]
  %v29 = vld [vmem:[%s0 + $0x38] sm:$0xf]
  %v30 = vld [vmem:[%s0 + $0x3c] sm:$0xf]
  %v31 = vld [vmem:[%s0 + $0x40] sm:$0xf]
  %v32 = vld [vmem:[%s0 + $0x44] sm:$0xf]
  %v33 = vld [vmem:[%s0 + $0x48] sm:$0xf]
  %v34 = vld [vmem:[%s0 + $0x4c] sm:$0xf]
  %v35 = vld [vmem:[%s0 + $0x50] sm:$0xf]
  %v36 = vld [vmem:[%s0 + $0x54] sm:$0xf]
  %v37 = vld [vmem:[%s0 + $0x58] sm:$0xf]
  %v38 = vld [vmem:[%s0 + $0x5c] sm:$0xf]
  %v39 = vld [vmem:[%s0 + $0x60] sm:$0xf]
  %v40 = vld [vmem:[%s0 + $0x64] sm:$0xf]
  %v41 = vld [vmem:[%s0 + $0x68] sm:$0xf]
  %v42 = vld [vmem:[%s0 + $0x6c] sm:$0xf]
  %v43 = vld [vmem:[%s0 + $0x70] sm:$0xf]
  %v44 = vld [vmem:[%s0 + $0x74] sm:$0xf]
  %v45 = vld [vmem:[%s0 + $0x78] sm:$0xf]
  %v46 = vld [vmem:[%s0 + $0x7c] sm:$0xf]
  %v47 = vld [vmem:[%s0 + $0x80] sm:$0xf]
  %v48 = vld [vmem:[%s0 + $0x84] sm:$0xf]
  %v49 = vld [vmem:[%s0 + $0x88] sm:$0xf]
  %v50 = vld [vmem:[%s0 + $0x8c] sm:$0xf]
  %v51 = vld [vmem:[%s0 + $0x90] sm:$0xf]
  %v52 = vld [vmem:[%s0 + $0x94] sm:$0xf]
  %v53 = vld [vmem:[%s0 + $0x98] sm:$0xf]
  %v54 = vld [vmem:[%s0 + $0x9c] sm:$0xf]
  %v55 = vld [vmem:[%s0 + $0xa0] sm:$0xf]
  %v56 = vld [vmem:[%s0 + $0xa4] sm:$0xf]
  %v57 = vld [vmem:[%s0 + $0xa8] sm:$0xf]
  %v58 = vld [vmem:[%s0 + $0xac] sm:$0xf]
  %v59 = vld [vmem:[%s0 + $0xb0] sm:$0xf]
  %v60 = vld [vmem:[%s0 + $0xb4] sm:$0xf]
  %v61 = vld [vmem:[%s0 + $0xb8] sm:$0xf]
  %v62 = vld [vmem:[%s0 + $0xbc] sm:$0xf]
  %v63 = vld [vmem:[%s0 + $0xc0] sm:$0xf]
  %v64 = vld [vmem:[%s0 + $0xc4] sm:$0xf]
  %v65 = vld [vmem:[%s0 + $0xc8] sm:$0xf]
  %v66 = vld [vmem:[%s0 + $0xcc] sm:$0xf]
  %v67 = vld [vmem:[%s0 + $0xd0] sm:$0xf]
  %v68 = vld [vmem:[%s0 + $0xd4] sm:$0xf]
  %v69 = vld [vmem:[%s0 + $0xd8] sm:$0xf]
  %v70 = vld [vmem:[%s0 + $0xdc] sm:$0xf]
  %v71 = vld [vmem:[%s0 + $0xe0] sm:$0xf]
  %v72 = vld [vmem:[%s0 + $0xe4] sm:$0xf]
  %v73 = vld [vmem:[%s0 + $0xe8] sm:$0xf]
  %v74 = vld [vmem:[%s0 + $0xec] sm:$0xf]
  %v75 = vld [vmem:[%s0 + $0xf0] sm:$0xf]
  %v76 = vld [vmem:[%s0 + $0xf4] sm:$0xf]
  %v77 = vld [vmem:[%s0 + $0xf8] sm:$0xf]
  %v78 = vld [vmem:[%s0 + $0xfc] sm:$0xf]
  %v79 = vld [vmem:[%s1] sm:$0xf]
  %v80 = vld [vmem:[%s1 + $0x4] sm:$0xf]
  %v81 = vld [vmem:[%s1 + $0x8] sm:$0xf]
  %v82 = vld [vmem:[%s1 + $0xc] sm:$0xf]
  %v83 = vld [vmem:[%s2] sm:$0x1]
  %v85 = vperm.slane %v83, 0
  %v151 = vunpack.c.l.b16 %v15
  %v152 = vunpack.c.l.b16 %v16
  %v153 = vunpack.c.l.b16 %v17
  %v154 = vunpack.c.l.b16 %v18
  %v155 = vunpack.c.l.b16 %v19
  %v156 = vunpack.c.l.b16 %v20
  %v157 = vunpack.c.l.b16 %v21
  %v158 = vunpack.c.l.b16 %v22
  %v159 = vunpack.c.l.b16 %v23
  %v160 = vunpack.c.l.b16 %v24
  %v161 = vunpack.c.l.b16 %v25
  %v162 = vunpack.c.l.b16 %v26
  %v163 = vunpack.c.l.b16 %v27
  %v164 = vunpack.c.l.b16 %v28
  %v165 = vunpack.c.l.b16 %v29
  %v166 = vunpack.c.l.b16 %v30
  %v167 = vunpack.c.l.b16 %v31
  %v168 = vunpack.c.l.b16 %v32
  %v169 = vunpack.c.l.b16 %v33
  %v170 = vunpack.c.l.b16 %v34
  %v171 = vunpack.c.l.b16 %v35
  %v172 = vunpack.c.l.b16 %v36
  %v173 = vunpack.c.l.b16 %v37
  %v174 = vunpack.c.l.b16 %v38
  %v175 = vunpack.c.l.b16 %v39
  %v176 = vunpack.c.l.b16 %v40
  %v177 = vunpack.c.l.b16 %v41
  %v178 = vunpack.c.l.b16 %v42
  %v179 = vunpack.c.l.b16 %v43
  %v180 = vunpack.c.l.b16 %v44
  %v181 = vunpack.c.l.b16 %v45
  %v182 = vunpack.c.l.b16 %v46
  %v183 = vunpack.c.l.b16 %v47
  %v184 = vunpack.c.l.b16 %v48
  %v185 = vunpack.c.l.b16 %v49
  %v186 = vunpack.c.l.b16 %v50
  %v187 = vunpack.c.l.b16 %v51
  %v188 = vunpack.c.l.b16 %v52
  %v189 = vunpack.c.l.b16 %v53
  %v190 = vunpack.c.l.b16 %v54
  %v191 = vunpack.c.l.b16 %v55
  %v192 = vunpack.c.l.b16 %v56
  %v193 = vunpack.c.l.b16 %v57
  %v194 = vunpack.c.l.b16 %v58
  %v195 = vunpack.c.l.b16 %v59
  %v196 = vunpack.c.l.b16 %v60
  %v197 = vunpack.c.l.b16 %v61
  %v198 = vunpack.c.l.b16 %v62
  %v199 = vunpack.c.l.b16 %v63
  %v200 = vunpack.c.l.b16 %v64
  %v201 = vunpack.c.l.b16 %v65
  %v202 = vunpack.c.l.b16 %v66
  %v203 = vunpack.c.l.b16 %v67
  %v204 = vunpack.c.l.b16 %v68
  %v205 = vunpack.c.l.b16 %v69
  %v206 = vunpack.c.l.b16 %v70
  %v207 = vunpack.c.l.b16 %v71
  %v208 = vunpack.c.l.b16 %v72
  %v209 = vunpack.c.l.b16 %v73
  %v210 = vunpack.c.l.b16 %v74
  %v211 = vunpack.c.l.b16 %v75
  %v212 = vunpack.c.l.b16 %v76
  %v213 = vunpack.c.l.b16 %v77
  %v214 = vunpack.c.l.b16 %v78
  %v215 = vpack.c.b16 %v152, %v151
  %v216 = vpack.c.b16 %v154, %v153
  %v217 = vpack.c.b16 %v156, %v155
  %v218 = vpack.c.b16 %v158, %v157
  %v219 = vpack.c.b16 %v160, %v159
  %v220 = vpack.c.b16 %v162, %v161
  %v221 = vpack.c.b16 %v164, %v163
  %v222 = vpack.c.b16 %v166, %v165
  %v223 = vpack.c.b16 %v168, %v167
  %v224 = vpack.c.b16 %v170, %v169
  %v225 = vpack.c.b16 %v172, %v171
  %v226 = vpack.c.b16 %v174, %v173
  %v227 = vpack.c.b16 %v176, %v175
  %v228 = vpack.c.b16 %v178, %v177
  %v229 = vpack.c.b16 %v180, %v179
  %v230 = vpack.c.b16 %v182, %v181
  %v231 = vpack.c.b16 %v184, %v183
  %v232 = vpack.c.b16 %v186, %v185
  %v233 = vpack.c.b16 %v188, %v187
  %v234 = vpack.c.b16 %v190, %v189
  %v235 = vpack.c.b16 %v192, %v191
  %v236 = vpack.c.b16 %v194, %v193
  %v237 = vpack.c.b16 %v196, %v195
  %v238 = vpack.c.b16 %v198, %v197
  %v239 = vpack.c.b16 %v200, %v199
  %v240 = vpack.c.b16 %v202, %v201
  %v241 = vpack.c.b16 %v204, %v203
  %v242 = vpack.c.b16 %v206, %v205
  %v243 = vpack.c.b16 %v208, %v207
  %v244 = vpack.c.b16 %v210, %v209
  %v245 = vpack.c.b16 %v212, %v211
  %v246 = vpack.c.b16 %v214, %v213
  %v251 = vunpack.c.l.b16 %v79
  %v252 = vunpack.c.l.b16 %v80
  %v253 = vunpack.c.l.b16 %v81
  %v254 = vunpack.c.l.b16 %v82
  %v255 = vpack.c.b16 %v252, %v251
  %v256 = vpack.c.b16 %v254, %v253
  %vm259 = vcmask 261120
  %v261 = vsel %vm259, %v215, 0
  %v264 = vsel %vm259, %v216, 0
  %v267 = vsel %vm259, %v217, 0
  %v270 = vsel %vm259, %v218, 0
  %v273 = vsel %vm259, %v219, 0
  %v276 = vsel %vm259, %v220, 0
  %v279 = vsel %vm259, %v221, 0
  %v282 = vsel %vm259, %v222, 0
  %v285 = vsel %vm259, %v223, 0
  %v288 = vsel %vm259, %v224, 0
  %v291 = vsel %vm259, %v225, 0
  %v294 = vsel %vm259, %v226, 0
  %v297 = vsel %vm259, %v227, 0
  %v300 = vsel %vm259, %v228, 0
  %v303 = vsel %vm259, %v229, 0
  %v306 = vsel %vm259, %v230, 0
  %v309 = vsel %vm259, %v231, 0
  %v312 = vsel %vm259, %v232, 0
  %v315 = vsel %vm259, %v233, 0
  %v318 = vsel %vm259, %v234, 0
  %v321 = vsel %vm259, %v235, 0
  %v324 = vsel %vm259, %v236, 0
  %v327 = vsel %vm259, %v237, 0
  %v330 = vsel %vm259, %v238, 0
  %v333 = vsel %vm259, %v239, 0
  %v336 = vsel %vm259, %v240, 0
  %v339 = vsel %vm259, %v241, 0
  %v342 = vsel %vm259, %v242, 0
  %v345 = vsel %vm259, %v243, 0
  %v348 = vsel %vm259, %v244, 0
  %v351 = vsel %vm259, %v245, 0
  %v354 = vsel %vm259, %v246, 0
  %356 = vmatpush.bf16.msra.mxu0 0
  %357 = vmatpush.bf16.msra.mxu0 0
  %358 = vmatpush.bf16.msra.mxu0 0
  %359 = vmatpush.bf16.msra.mxu0 0
  %360 = vmatpush.bf16.msra.mxu0 0
  %361 = vmatpush.bf16.msra.mxu0 0
  %362 = vmatpush.bf16.msra.mxu0 %v256
  %363 = vmatpush.bf16.msra.mxu0 %v255
  %364 = vmatmul.bf16.gmra.mxu0 %v261
  %v365 = vpop.f32.mrf.mxu0
  %v366 = vadd.f32 %v85, %v365
  %v367 = vpop.f32.mrf.mxu0
  %v368 = vadd.f32 %v85, %v367
  %369 = vmatmul.bf16.gmra.mxu0 %v264
  %v370 = vpop.f32.mrf.mxu0
  %v371 = vadd.f32 %v85, %v370
  %v372 = vpop.f32.mrf.mxu0
  %v373 = vadd.f32 %v85, %v372
  %374 = vmatmul.bf16.gmra.mxu0 %v267
  %v375 = vpop.f32.mrf.mxu0
  %v376 = vadd.f32 %v85, %v375
  %v377 = vpop.f32.mrf.mxu0
  %v378 = vadd.f32 %v85, %v377
  %379 = vmatmul.bf16.gmra.mxu0 %v270
  %v380 = vpop.f32.mrf.mxu0
  %v381 = vadd.f32 %v85, %v380
  %v382 = vpop.f32.mrf.mxu0
  %v383 = vadd.f32 %v85, %v382
  %384 = vmatmul.bf16.gmra.mxu0 %v273
  %v385 = vpop.f32.mrf.mxu0
  %v386 = vadd.f32 %v85, %v385
  %v387 = vpop.f32.mrf.mxu0
  %v388 = vadd.f32 %v85, %v387
  %389 = vmatmul.bf16.gmra.mxu0 %v276
  %v390 = vpop.f32.mrf.mxu0
  %v391 = vadd.f32 %v85, %v390
  %v392 = vpop.f32.mrf.mxu0
  %v393 = vadd.f32 %v85, %v392
  %394 = vmatmul.bf16.gmra.mxu0 %v279
  %v395 = vpop.f32.mrf.mxu0
  %v396 = vadd.f32 %v85, %v395
  %v397 = vpop.f32.mrf.mxu0
  %v398 = vadd.f32 %v85, %v397
  %399 = vmatmul.bf16.gmra.mxu0 %v282
  %v400 = vpop.f32.mrf.mxu0
  %v401 = vadd.f32 %v85, %v400
  %v402 = vpop.f32.mrf.mxu0
  %v403 = vadd.f32 %v85, %v402
  %404 = vmatmul.bf16.gmra.mxu0 %v285
  %v405 = vpop.f32.mrf.mxu0
  %v406 = vadd.f32 %v85, %v405
  %v407 = vpop.f32.mrf.mxu0
  %v408 = vadd.f32 %v85, %v407
  %409 = vmatmul.bf16.gmra.mxu0 %v288
  %v410 = vpop.f32.mrf.mxu0
  %v411 = vadd.f32 %v85, %v410
  %v412 = vpop.f32.mrf.mxu0
  %v413 = vadd.f32 %v85, %v412
  %414 = vmatmul.bf16.gmra.mxu0 %v291
  %v415 = vpop.f32.mrf.mxu0
  %v416 = vadd.f32 %v85, %v415
  %v417 = vpop.f32.mrf.mxu0
  %v418 = vadd.f32 %v85, %v417
  %419 = vmatmul.bf16.gmra.mxu0 %v294
  %v420 = vpop.f32.mrf.mxu0
  %v421 = vadd.f32 %v85, %v420
  %v422 = vpop.f32.mrf.mxu0
  %v423 = vadd.f32 %v85, %v422
  %424 = vmatmul.bf16.gmra.mxu0 %v297
  %v425 = vpop.f32.mrf.mxu0
  %v426 = vadd.f32 %v85, %v425
  %v427 = vpop.f32.mrf.mxu0
  %v428 = vadd.f32 %v85, %v427
  %429 = vmatmul.bf16.gmra.mxu0 %v300
  %v430 = vpop.f32.mrf.mxu0
  %v431 = vadd.f32 %v85, %v430
  %v432 = vpop.f32.mrf.mxu0
  %v433 = vadd.f32 %v85, %v432
  %434 = vmatmul.bf16.gmra.mxu0 %v303
  %v435 = vpop.f32.mrf.mxu0
  %v436 = vadd.f32 %v85, %v435
  %v437 = vpop.f32.mrf.mxu0
  %v438 = vadd.f32 %v85, %v437
  %439 = vmatmul.bf16.gmra.mxu0 %v306
  %v440 = vpop.f32.mrf.mxu0
  %v441 = vadd.f32 %v85, %v440
  %v442 = vpop.f32.mrf.mxu0
  %v443 = vadd.f32 %v85, %v442
  %444 = vmatmul.bf16.gmra.mxu0 %v309
  %v445 = vpop.f32.mrf.mxu0
  %v446 = vadd.f32 %v85, %v445
  %v447 = vpop.f32.mrf.mxu0
  %v448 = vadd.f32 %v85, %v447
  %449 = vmatmul.bf16.gmra.mxu0 %v312
  %v450 = vpop.f32.mrf.mxu0
  %v451 = vadd.f32 %v85, %v450
  %v452 = vpop.f32.mrf.mxu0
  %v453 = vadd.f32 %v85, %v452
  %454 = vmatmul.bf16.gmra.mxu0 %v315
  %v455 = vpop.f32.mrf.mxu0
  %v456 = vadd.f32 %v85, %v455
  %v457 = vpop.f32.mrf.mxu0
  %v458 = vadd.f32 %v85, %v457
  %459 = vmatmul.bf16.gmra.mxu0 %v318
  %v460 = vpop.f32.mrf.mxu0
  %v461 = vadd.f32 %v85, %v460
  %v462 = vpop.f32.mrf.mxu0
  %v463 = vadd.f32 %v85, %v462
  %464 = vmatmul.bf16.gmra.mxu0 %v321
  %v465 = vpop.f32.mrf.mxu0
  %v466 = vadd.f32 %v85, %v465
  %v467 = vpop.f32.mrf.mxu0
  %v468 = vadd.f32 %v85, %v467
  %469 = vmatmul.bf16.gmra.mxu0 %v324
  %v470 = vpop.f32.mrf.mxu0
  %v471 = vadd.f32 %v85, %v470
  %v472 = vpop.f32.mrf.mxu0
  %v473 = vadd.f32 %v85, %v472
  %474 = vmatmul.bf16.gmra.mxu0 %v327
  %v475 = vpop.f32.mrf.mxu0
  %v476 = vadd.f32 %v85, %v475
  %v477 = vpop.f32.mrf.mxu0
  %v478 = vadd.f32 %v85, %v477
  %479 = vmatmul.bf16.gmra.mxu0 %v330
  %v480 = vpop.f32.mrf.mxu0
  %v481 = vadd.f32 %v85, %v480
  %v482 = vpop.f32.mrf.mxu0
  %v483 = vadd.f32 %v85, %v482
  %484 = vmatmul.bf16.gmra.mxu0 %v333
  %v485 = vpop.f32.mrf.mxu0
  %v486 = vadd.f32 %v85, %v485
  %v487 = vpop.f32.mrf.mxu0
  %v488 = vadd.f32 %v85, %v487
  %489 = vmatmul.bf16.gmra.mxu0 %v336
  %v490 = vpop.f32.mrf.mxu0
  %v491 = vadd.f32 %v85, %v490
  %v492 = vpop.f32.mrf.mxu0
  %v493 = vadd.f32 %v85, %v492
  %494 = vmatmul.bf16.gmra.mxu0 %v339
  %v495 = vpop.f32.mrf.mxu0
  %v496 = vadd.f32 %v85, %v495
  %v497 = vpop.f32.mrf.mxu0
  %v498 = vadd.f32 %v85, %v497
  %499 = vmatmul.bf16.gmra.mxu0 %v342
  %v500 = vpop.f32.mrf.mxu0
  %v501 = vadd.f32 %v85, %v500
  %v502 = vpop.f32.mrf.mxu0
  %v503 = vadd.f32 %v85, %v502
  %504 = vmatmul.bf16.gmra.mxu0 %v345
  %v505 = vpop.f32.mrf.mxu0
  %v506 = vadd.f32 %v85, %v505
  %v507 = vpop.f32.mrf.mxu0
  %v508 = vadd.f32 %v85, %v507
  %509 = vmatmul.bf16.gmra.mxu0 %v348
  %v510 = vpop.f32.mrf.mxu0
  %v511 = vadd.f32 %v85, %v510
  %v512 = vpop.f32.mrf.mxu0
  %v513 = vadd.f32 %v85, %v512
  %514 = vmatmul.bf16.gmra.mxu0 %v351
  %v515 = vpop.f32.mrf.mxu0
  %v516 = vadd.f32 %v85, %v515
  %v517 = vpop.f32.mrf.mxu0
  %v518 = vadd.f32 %v85, %v517
  %519 = vmatmul.bf16.gmra.mxu0 %v354
  %v520 = vpop.f32.mrf.mxu0
  %v521 = vadd.f32 %v85, %v520
  %v522 = vpop.f32.mrf.mxu0
  %v523 = vadd.f32 %v85, %v522
  %524 = vdwg.mxu0
  %v525 = vmax.f32 %v366, 0.0
  %v526 = vmax.f32 %v368, 0.0
  %v527 = vmax.f32 %v371, 0.0
  %v528 = vmax.f32 %v373, 0.0
  %v529 = vmax.f32 %v376, 0.0
  %v530 = vmax.f32 %v378, 0.0
  %v531 = vmax.f32 %v381, 0.0
  %v532 = vmax.f32 %v383, 0.0
  %v533 = vmax.f32 %v386, 0.0
  %v534 = vmax.f32 %v388, 0.0
  %v535 = vmax.f32 %v391, 0.0
  %v536 = vmax.f32 %v393, 0.0
  %v537 = vmax.f32 %v396, 0.0
  %v538 = vmax.f32 %v398, 0.0
  %v539 = vmax.f32 %v401, 0.0
  %v540 = vmax.f32 %v403, 0.0
  %v541 = vmax.f32 %v406, 0.0
  %v542 = vmax.f32 %v408, 0.0
  %v543 = vmax.f32 %v411, 0.0
  %v544 = vmax.f32 %v413, 0.0
  %v545 = vmax.f32 %v416, 0.0
  %v546 = vmax.f32 %v418, 0.0
  %v547 = vmax.f32 %v421, 0.0
  %v548 = vmax.f32 %v423, 0.0
  %v549 = vmax.f32 %v426, 0.0
  %v550 = vmax.f32 %v428, 0.0
  %v551 = vmax.f32 %v431, 0.0
  %v552 = vmax.f32 %v433, 0.0
  %v553 = vmax.f32 %v436, 0.0
  %v554 = vmax.f32 %v438, 0.0
  %v555 = vmax.f32 %v441, 0.0
  %v556 = vmax.f32 %v443, 0.0
  %v557 = vmax.f32 %v446, 0.0
  %v558 = vmax.f32 %v448, 0.0
  %v559 = vmax.f32 %v451, 0.0
  %v560 = vmax.f32 %v453, 0.0
  %v561 = vmax.f32 %v456, 0.0
  %v562 = vmax.f32 %v458, 0.0
  %v563 = vmax.f32 %v461, 0.0
  %v564 = vmax.f32 %v463, 0.0
  %v565 = vmax.f32 %v466, 0.0
  %v566 = vmax.f32 %v468, 0.0
  %v567 = vmax.f32 %v471, 0.0
  %v568 = vmax.f32 %v473, 0.0
  %v569 = vmax.f32 %v476, 0.0
  %v570 = vmax.f32 %v478, 0.0
  %v571 = vmax.f32 %v481, 0.0
  %v572 = vmax.f32 %v483, 0.0
  %v573 = vmax.f32 %v486, 0.0
  %v574 = vmax.f32 %v488, 0.0
  %v575 = vmax.f32 %v491, 0.0
  %v576 = vmax.f32 %v493, 0.0
  %v577 = vmax.f32 %v496, 0.0
  %v578 = vmax.f32 %v498, 0.0
  %v579 = vmax.f32 %v501, 0.0
  %v580 = vmax.f32 %v503, 0.0
  %v581 = vmax.f32 %v506, 0.0
  %v582 = vmax.f32 %v508, 0.0
  %v583 = vmax.f32 %v511, 0.0
  %v584 = vmax.f32 %v513, 0.0
  %v585 = vmax.f32 %v516, 0.0
  %v586 = vmax.f32 %v518, 0.0
  %v587 = vmax.f32 %v521, 0.0
  %v588 = vmax.f32 %v523, 0.0
  %v589 = vpack.c.bf16 %v525, %v525
  %v590 = vpack.c.bf16 %v526, %v526
  %v591 = vpack.c.bf16 %v527, %v527
  %v592 = vpack.c.bf16 %v528, %v528
  %v593 = vpack.c.bf16 %v529, %v529
  %v594 = vpack.c.bf16 %v530, %v530
  %v595 = vpack.c.bf16 %v531, %v531
  %v596 = vpack.c.bf16 %v532, %v532
  %v597 = vpack.c.bf16 %v533, %v533
  %v598 = vpack.c.bf16 %v534, %v534
  %v599 = vpack.c.bf16 %v535, %v535
  %v600 = vpack.c.bf16 %v536, %v536
  %v601 = vpack.c.bf16 %v537, %v537
  %v602 = vpack.c.bf16 %v538, %v538
  %v603 = vpack.c.bf16 %v539, %v539
  %v604 = vpack.c.bf16 %v540, %v540
  %v605 = vpack.c.bf16 %v541, %v541
  %v606 = vpack.c.bf16 %v542, %v542
  %v607 = vpack.c.bf16 %v543, %v543
  %v608 = vpack.c.bf16 %v544, %v544
  %v609 = vpack.c.bf16 %v545, %v545
  %v610 = vpack.c.bf16 %v546, %v546
  %v611 = vpack.c.bf16 %v547, %v547
  %v612 = vpack.c.bf16 %v548, %v548
  %v613 = vpack.c.bf16 %v549, %v549
  %v614 = vpack.c.bf16 %v550, %v550
  %v615 = vpack.c.bf16 %v551, %v551
  %v616 = vpack.c.bf16 %v552, %v552
  %v617 = vpack.c.bf16 %v553, %v553
  %v618 = vpack.c.bf16 %v554, %v554
  %v619 = vpack.c.bf16 %v555, %v555
  %v620 = vpack.c.bf16 %v556, %v556
  %v621 = vpack.c.bf16 %v557, %v557
  %v622 = vpack.c.bf16 %v558, %v558
  %v623 = vpack.c.bf16 %v559, %v559
  %v624 = vpack.c.bf16 %v560, %v560
  %v625 = vpack.c.bf16 %v561, %v561
  %v626 = vpack.c.bf16 %v562, %v562
  %v627 = vpack.c.bf16 %v563, %v563
  %v628 = vpack.c.bf16 %v564, %v564
  %v629 = vpack.c.bf16 %v565, %v565
  %v630 = vpack.c.bf16 %v566, %v566
  %v631 = vpack.c.bf16 %v567, %v567
  %v632 = vpack.c.bf16 %v568, %v568
  %v633 = vpack.c.bf16 %v569, %v569
  %v634 = vpack.c.bf16 %v570, %v570
  %v635 = vpack.c.bf16 %v571, %v571
  %v636 = vpack.c.bf16 %v572, %v572
  %v637 = vpack.c.bf16 %v573, %v573
  %v638 = vpack.c.bf16 %v574, %v574
  %v639 = vpack.c.bf16 %v575, %v575
  %v640 = vpack.c.bf16 %v576, %v576
  %v641 = vpack.c.bf16 %v577, %v577
  %v642 = vpack.c.bf16 %v578, %v578
  %v643 = vpack.c.bf16 %v579, %v579
  %v644 = vpack.c.bf16 %v580, %v580
  %v645 = vpack.c.bf16 %v581, %v581
  %v646 = vpack.c.bf16 %v582, %v582
  %v647 = vpack.c.bf16 %v583, %v583
  %v648 = vpack.c.bf16 %v584, %v584
  %v649 = vpack.c.bf16 %v585, %v585
  %v650 = vpack.c.bf16 %v586, %v586
  %v651 = vpack.c.bf16 %v587, %v587
  %v652 = vpack.c.bf16 %v588, %v588
  %vm653 = vcmask 125952
  %654 = vst.msk [vmem:[%s3] sm:$0xf] %vm653, %v589
  %655 = vst.msk [vmem:[%s3 + $0x4] sm:$0xf] %vm653, %v590
  %656 = vst.msk [vmem:[%s3 + $0x8] sm:$0xf] %vm653, %v591
  %657 = vst.msk [vmem:[%s3 + $0xc] sm:$0xf] %vm653, %v592
  %658 = vst.msk [vmem:[%s3 + $0x10] sm:$0xf] %vm653, %v593
  %659 = vst.msk [vmem:[%s3 + $0x14] sm:$0xf] %vm653, %v594
  %660 = vst.msk [vmem:[%s3 + $0x18] sm:$0xf] %vm653, %v595
  %661 = vst.msk [vmem:[%s3 + $0x1c] sm:$0xf] %vm653, %v596
  %662 = vst.msk [vmem:[%s3 + $0x20] sm:$0xf] %vm653, %v597
  %663 = vst.msk [vmem:[%s3 + $0x24] sm:$0xf] %vm653, %v598
  %664 = vst.msk [vmem:[%s3 + $0x28] sm:$0xf] %vm653, %v599
  %665 = vst.msk [vmem:[%s3 + $0x2c] sm:$0xf] %vm653, %v600
  %666 = vst.msk [vmem:[%s3 + $0x30] sm:$0xf] %vm653, %v601
  %667 = vst.msk [vmem:[%s3 + $0x34] sm:$0xf] %vm653, %v602
  %668 = vst.msk [vmem:[%s3 + $0x38] sm:$0xf] %vm653, %v603
  %669 = vst.msk [vmem:[%s3 + $0x3c] sm:$0xf] %vm653, %v604
  %670 = vst.msk [vmem:[%s3 + $0x40] sm:$0xf] %vm653, %v605
  %671 = vst.msk [vmem:[%s3 + $0x44] sm:$0xf] %vm653, %v606
  %672 = vst.msk [vmem:[%s3 + $0x48] sm:$0xf] %vm653, %v607
  %673 = vst.msk [vmem:[%s3 + $0x4c] sm:$0xf] %vm653, %v608
  %674 = vst.msk [vmem:[%s3 + $0x50] sm:$0xf] %vm653, %v609
  %675 = vst.msk [vmem:[%s3 + $0x54] sm:$0xf] %vm653, %v610
  %676 = vst.msk [vmem:[%s3 + $0x58] sm:$0xf] %vm653, %v611
  %677 = vst.msk [vmem:[%s3 + $0x5c] sm:$0xf] %vm653, %v612
  %678 = vst.msk [vmem:[%s3 + $0x60] sm:$0xf] %vm653, %v613
  %679 = vst.msk [vmem:[%s3 + $0x64] sm:$0xf] %vm653, %v614
  %680 = vst.msk [vmem:[%s3 + $0x68] sm:$0xf] %vm653, %v615
  %681 = vst.msk [vmem:[%s3 + $0x6c] sm:$0xf] %vm653, %v616
  %682 = vst.msk [vmem:[%s3 + $0x70] sm:$0xf] %vm653, %v617
  %683 = vst.msk [vmem:[%s3 + $0x74] sm:$0xf] %vm653, %v618
  %684 = vst.msk [vmem:[%s3 + $0x78] sm:$0xf] %vm653, %v619
  %685 = vst.msk [vmem:[%s3 + $0x7c] sm:$0xf] %vm653, %v620
  %686 = vst.msk [vmem:[%s3 + $0x80] sm:$0xf] %vm653, %v621
  %687 = vst.msk [vmem:[%s3 + $0x84] sm:$0xf] %vm653, %v622
  %688 = vst.msk [vmem:[%s3 + $0x88] sm:$0xf] %vm653, %v623
  %689 = vst.msk [vmem:[%s3 + $0x8c] sm:$0xf] %vm653, %v624
  %690 = vst.msk [vmem:[%s3 + $0x90] sm:$0xf] %vm653, %v625
  %691 = vst.msk [vmem:[%s3 + $0x94] sm:$0xf] %vm653, %v626
  %692 = vst.msk [vmem:[%s3 + $0x98] sm:$0xf] %vm653, %v627
  %693 = vst.msk [vmem:[%s3 + $0x9c] sm:$0xf] %vm653, %v628
  %694 = vst.msk [vmem:[%s3 + $0xa0] sm:$0xf] %vm653, %v629
  %695 = vst.msk [vmem:[%s3 + $0xa4] sm:$0xf] %vm653, %v630
  %696 = vst.msk [vmem:[%s3 + $0xa8] sm:$0xf] %vm653, %v631
  %697 = vst.msk [vmem:[%s3 + $0xac] sm:$0xf] %vm653, %v632
  %698 = vst.msk [vmem:[%s3 + $0xb0] sm:$0xf] %vm653, %v633
  %699 = vst.msk [vmem:[%s3 + $0xb4] sm:$0xf] %vm653, %v634
  %700 = vst.msk [vmem:[%s3 + $0xb8] sm:$0xf] %vm653, %v635
  %701 = vst.msk [vmem:[%s3 + $0xbc] sm:$0xf] %vm653, %v636
  %702 = vst.msk [vmem:[%s3 + $0xc0] sm:$0xf] %vm653, %v637
  %703 = vst.msk [vmem:[%s3 + $0xc4] sm:$0xf] %vm653, %v638
  %704 = vst.msk [vmem:[%s3 + $0xc8] sm:$0xf] %vm653, %v639
  %705 = vst.msk [vmem:[%s3 + $0xcc] sm:$0xf] %vm653, %v640
  %706 = vst.msk [vmem:[%s3 + $0xd0] sm:$0xf] %vm653, %v641
  %707 = vst.msk [vmem:[%s3 + $0xd4] sm:$0xf] %vm653, %v642
  %708 = vst.msk [vmem:[%s3 + $0xd8] sm:$0xf] %vm653, %v643
  %709 = vst.msk [vmem:[%s3 + $0xdc] sm:$0xf] %vm653, %v644
  %710 = vst.msk [vmem:[%s3 + $0xe0] sm:$0xf] %vm653, %v645
  %711 = vst.msk [vmem:[%s3 + $0xe4] sm:$0xf] %vm653, %v646
  %712 = vst.msk [vmem:[%s3 + $0xe8] sm:$0xf] %vm653, %v647
  %713 = vst.msk [vmem:[%s3 + $0xec] sm:$0xf] %vm653, %v648
  %714 = vst.msk [vmem:[%s3 + $0xf0] sm:$0xf] %vm653, %v649
  %715 = vst.msk [vmem:[%s3 + $0xf4] sm:$0xf] %vm653, %v650
  %716 = vst.msk [vmem:[%s3 + $0xf8] sm:$0xf] %vm653, %v651
  %717 = vst.msk [vmem:[%s3 + $0xfc] sm:$0xf] %vm653, %v652
  // Predicated region
  $region14: #{forward.3} parent=0 // pred_check
    _
  $region15: #{forward.3} parent=0 // pred_check_branch
    %719 = sbr.rel (0) target = $region17
  $region16: #{forward.3} parent=0 // pred_region
    _
  $region17: #{forward.3} parent=0 // pred_fallthru
    _
  // Predicated region
  $region18: #{forward.3} parent=0 // pred_check
    _
  $region19: #{forward.3} parent=0 // pred_check_branch
    %721 = sbr.rel (0) target = $region21
  $region20: #{forward.3} parent=0 // pred_region
    _
  $region21: #{forward.3} parent=0 // pred_fallthru
    _

// kernel: forward.4
$region0: #{forward.4}
  #allocation0 [shape = 'u32[]', space=smem, size = 0x4, offset = 0x4, fixed_abs, tag = 'smem constant byte address 0x4 - core index']
  #allocation1 [shape = 'u32[72,128]{1,0:T(1,128)}', space=vmem, size = 0x9000, scoped, tag = 'internal scratch']
  %s0 = inlined_call_operand.vmem [shape: bf16[128,144], index: 0, kind: input, shape index: {}]
  %s1 = inlined_call_operand.vmem [shape: bf16[144,24], index: 1, kind: input, shape index: {}]
  %s2 = inlined_call_operand.vmem [shape: f32[1,24], index: 2, kind: input, shape index: {}]
  %s3 = inlined_call_operand.vmem [shape: bf16[128,24], index: 3, kind: output, shape index: {}]
  %s4 = sld [smem:[#allocation0]]
  $region22: #{forward.4} parent=0
    _
  %s6 = ssub.s32 1, %s4
  %s7 = scalar_select 0, %s6, %s4
  // Predicated region
  $region2: #{forward.4} parent=0 // pred_check
    _
  $region3: #{forward.4} parent=0 // pred_check_branch
    %9 = sbr.rel (0) target = $region5
  $region4: #{forward.4} parent=0 // pred_region
    _
  $region5: #{forward.4} parent=0 // pred_fallthru
    _
  // Predicated region
  $region6: #{forward.4} parent=0 // pred_check
    _
  $region7: #{forward.4} parent=0 // pred_check_branch
    %11 = sbr.rel (0) target = $region9
  $region8: #{forward.4} parent=0 // pred_region
    _
  $region9: #{forward.4} parent=0 // pred_fallthru
    _
  // Predicated region
  $region10: #{forward.4} parent=0 // pred_check
    _
  $region11: #{forward.4} parent=0 // pred_check_branch
    %13 = sbr.rel (0) target = $region13
  $region12: #{forward.4} parent=0 // pred_region
    _
  $region13: #{forward.4} parent=0 // pred_fallthru
    _
  %v15 = vld [vmem:[%s0] sm:$0xff]
  %v16 = vld [vmem:[%s0 + $0x8] sm:$0xff]
  %v17 = vld [vmem:[%s0 + $0x10] sm:$0xff]
  %v18 = vld [vmem:[%s0 + $0x18] sm:$0xff]
  %v19 = vld [vmem:[%s0 + $0x20] sm:$0xff]
  %v20 = vld [vmem:[%s0 + $0x28] sm:$0xff]
  %v21 = vld [vmem:[%s0 + $0x30] sm:$0xff]
  %v22 = vld [vmem:[%s0 + $0x38] sm:$0xff]
  %v23 = vld [vmem:[%s0 + $0x40] sm:$0xff]
  %v24 = vld [vmem:[%s0 + $0x48] sm:$0xff]
  %v25 = vld [vmem:[%s0 + $0x50] sm:$0xff]
  %v26 = vld [vmem:[%s0 + $0x58] sm:$0xff]
  %v27 = vld [vmem:[%s0 + $0x60] sm:$0xff]
  %v28 = vld [vmem:[%s0 + $0x68] sm:$0xff]
  %v29 = vld [vmem:[%s0 + $0x70] sm:$0xff]
  %v30 = vld [vmem:[%s0 + $0x78] sm:$0xff]
  %v31 = vld [vmem:[%s1] sm:$0xf]
  %v32 = vld [vmem:[%s1 + $0x4] sm:$0xf]
  %v33 = vld [vmem:[%s1 + $0x8] sm:$0xf]
  %v34 = vld [vmem:[%s1 + $0xc] sm:$0xf]
  %v35 = vld [vmem:[%s1 + $0x10] sm:$0xf]
  %v36 = vld [vmem:[%s1 + $0x14] sm:$0xf]
  %v37 = vld [vmem:[%s1 + $0x18] sm:$0xf]
  %v38 = vld [vmem:[%s1 + $0x1c] sm:$0xf]
  %v39 = vld [vmem:[%s1 + $0x20] sm:$0xf]
  %v40 = vld [vmem:[%s1 + $0x24] sm:$0xf]
  %v41 = vld [vmem:[%s1 + $0x28] sm:$0xf]
  %v42 = vld [vmem:[%s1 + $0x2c] sm:$0xf]
  %v43 = vld [vmem:[%s1 + $0x30] sm:$0xf]
  %v44 = vld [vmem:[%s1 + $0x34] sm:$0xf]
  %v45 = vld [vmem:[%s1 + $0x38] sm:$0xf]
  %v46 = vld [vmem:[%s1 + $0x3c] sm:$0xf]
  %v47 = vld [vmem:[%s1 + $0x40] sm:$0xf]
  %v48 = vld [vmem:[%s1 + $0x44] sm:$0xf]
  %v49 = vld [vmem:[%s2] sm:$0x1]
  %v51 = vperm.slane %v49, 0
  %v69 = vunpack.c.l.b16 %v15
  %v70 = vunpack.c.h.b16 %v15
  %v71 = vunpack.c.l.b16 %v16
  %v72 = vunpack.c.h.b16 %v16
  %v73 = vunpack.c.l.b16 %v17
  %v74 = vunpack.c.h.b16 %v17
  %v75 = vunpack.c.l.b16 %v18
  %v76 = vunpack.c.h.b16 %v18
  %v77 = vunpack.c.l.b16 %v19
  %v78 = vunpack.c.h.b16 %v19
  %v79 = vunpack.c.l.b16 %v20
  %v80 = vunpack.c.h.b16 %v20
  %v81 = vunpack.c.l.b16 %v21
  %v82 = vunpack.c.h.b16 %v21
  %v83 = vunpack.c.l.b16 %v22
  %v84 = vunpack.c.h.b16 %v22
  %v85 = vunpack.c.l.b16 %v23
  %v86 = vunpack.c.h.b16 %v23
  %v87 = vunpack.c.l.b16 %v24
  %v88 = vunpack.c.h.b16 %v24
  %v89 = vunpack.c.l.b16 %v25
  %v90 = vunpack.c.h.b16 %v25
  %v91 = vunpack.c.l.b16 %v26
  %v92 = vunpack.c.h.b16 %v26
  %v93 = vunpack.c.l.b16 %v27
  %v94 = vunpack.c.h.b16 %v27
  %v95 = vunpack.c.l.b16 %v28
  %v96 = vunpack.c.h.b16 %v28
  %v97 = vunpack.c.l.b16 %v29
  %v98 = vunpack.c.h.b16 %v29
  %v99 = vunpack.c.l.b16 %v30
  %v100 = vunpack.c.h.b16 %v30
  %v101 = vpack.c.b16 %v71, %v69
  %v102 = vpack.c.b16 %v72, %v70
  %v103 = vpack.c.b16 %v75, %v73
  %v104 = vpack.c.b16 %v76, %v74
  %v105 = vpack.c.b16 %v79, %v77
  %v106 = vpack.c.b16 %v80, %v78
  %v107 = vpack.c.b16 %v83, %v81
  %v108 = vpack.c.b16 %v84, %v82
  %v109 = vpack.c.b16 %v87, %v85
  %v110 = vpack.c.b16 %v88, %v86
  %v111 = vpack.c.b16 %v91, %v89
  %v112 = vpack.c.b16 %v92, %v90
  %v113 = vpack.c.b16 %v95, %v93
  %v114 = vpack.c.b16 %v96, %v94
  %v115 = vpack.c.b16 %v99, %v97
  %v116 = vpack.c.b16 %v100, %v98
  %v143 = vunpack.c.l.b16 %v31
  %v144 = vunpack.c.l.b16 %v32
  %v145 = vunpack.c.l.b16 %v33
  %v146 = vunpack.c.l.b16 %v34
  %v147 = vunpack.c.l.b16 %v35
  %v148 = vunpack.c.l.b16 %v36
  %v149 = vunpack.c.l.b16 %v37
  %v150 = vunpack.c.l.b16 %v38
  %v151 = vunpack.c.l.b16 %v39
  %v152 = vunpack.c.l.b16 %v40
  %v153 = vunpack.c.l.b16 %v41
  %v154 = vunpack.c.l.b16 %v42
  %v155 = vunpack.c.l.b16 %v43
  %v156 = vunpack.c.l.b16 %v44
  %v157 = vunpack.c.l.b16 %v45
  %v158 = vunpack.c.l.b16 %v46
  %v159 = vunpack.c.l.b16 %v47
  %v160 = vunpack.c.l.b16 %v48
  %v161 = vpack.c.b16 %v144, %v143
  %v162 = vpack.c.b16 %v146, %v145
  %v163 = vpack.c.b16 %v148, %v147
  %v164 = vpack.c.b16 %v150, %v149
  %v165 = vpack.c.b16 %v152, %v151
  %v166 = vpack.c.b16 %v154, %v153
  %v167 = vpack.c.b16 %v156, %v155
  %v168 = vpack.c.b16 %v158, %v157
  %v169 = vpack.c.b16 %v160, %v159
  %vm179 = vcmask 130048
  %v181 = vsel %vm179, %v102, 0
  %v184 = vsel %vm179, %v104, 0
  %v187 = vsel %vm179, %v106, 0
  %v190 = vsel %vm179, %v108, 0
  %v193 = vsel %vm179, %v110, 0
  %v196 = vsel %vm179, %v112, 0
  %v199 = vsel %vm179, %v114, 0
  %v202 = vsel %vm179, %v116, 0
  %204 = vmatpush.bf16.msra.mxu0 %v168
  %205 = vmatpush.bf16.msra.mxu0 %v167
  %206 = vmatpush.bf16.msra.mxu0 %v166
  %207 = vmatpush.bf16.msra.mxu0 %v165
  %208 = vmatpush.bf16.msra.mxu0 %v164
  %209 = vmatpush.bf16.msra.mxu0 %v163
  %210 = vmatpush.bf16.msra.mxu0 %v162
  %211 = vmatpush.bf16.msra.mxu0 %v161
  %212 = vmatmul.bf16.gmra.mxu0 %v101
  %v213 = vpop.f32.mrf.mxu0
  %v214 = vadd.f32 %v51, %v213
  %v215 = vpop.f32.mrf.mxu0
  %v216 = vadd.f32 %v51, %v215
  %217 = vmatmul.bf16.gmra.mxu0 %v103
  %v218 = vpop.f32.mrf.mxu0
  %v219 = vadd.f32 %v51, %v218
  %v220 = vpop.f32.mrf.mxu0
  %v221 = vadd.f32 %v51, %v220
  %222 = vmatmul.bf16.gmra.mxu0 %v105
  %v223 = vpop.f32.mrf.mxu0
  %v224 = vadd.f32 %v51, %v223
  %v225 = vpop.f32.mrf.mxu0
  %v226 = vadd.f32 %v51, %v225
  %227 = vmatmul.bf16.gmra.mxu0 %v107
  %v228 = vpop.f32.mrf.mxu0
  %v229 = vadd.f32 %v51, %v228
  %v230 = vpop.f32.mrf.mxu0
  %v231 = vadd.f32 %v51, %v230
  %232 = vmatmul.bf16.gmra.mxu0 %v109
  %v233 = vpop.f32.mrf.mxu0
  %v234 = vadd.f32 %v51, %v233
  %v235 = vpop.f32.mrf.mxu0
  %v236 = vadd.f32 %v51, %v235
  %237 = vmatmul.bf16.gmra.mxu0 %v111
  %v238 = vpop.f32.mrf.mxu0
  %v239 = vadd.f32 %v51, %v238
  %v240 = vpop.f32.mrf.mxu0
  %v241 = vadd.f32 %v51, %v240
  %242 = vmatmul.bf16.gmra.mxu0 %v113
  %v243 = vpop.f32.mrf.mxu0
  %v244 = vadd.f32 %v51, %v243
  %v245 = vpop.f32.mrf.mxu0
  %v246 = vadd.f32 %v51, %v245
  %247 = vmatmul.bf16.gmra.mxu0 %v115
  %v248 = vpop.f32.mrf.mxu0
  %v249 = vadd.f32 %v51, %v248
  %v250 = vpop.f32.mrf.mxu0
  %v251 = vadd.f32 %v51, %v250
  %252 = vdwg.mxu0
  %253 = vmatpush.bf16.msra.mxu0 0
  %254 = vmatpush.bf16.msra.mxu0 0
  %255 = vmatpush.bf16.msra.mxu0 0
  %256 = vmatpush.bf16.msra.mxu0 0
  %257 = vmatpush.bf16.msra.mxu0 0
  %258 = vmatpush.bf16.msra.mxu0 0
  %259 = vmatpush.bf16.msra.mxu0 0
  %260 = vmatpush.bf16.msra.mxu0 %v169
  %261 = vmatmul.bf16.gmra.mxu0 %v181
  %v262 = vpop.f32.mrf.mxu0
  %v263 = vadd.f32 %v214, %v262
  %v264 = vpop.f32.mrf.mxu0
  %v265 = vadd.f32 %v216, %v264
  %266 = vmatmul.bf16.gmra.mxu0 %v184
  %v267 = vpop.f32.mrf.mxu0
  %v268 = vadd.f32 %v219, %v267
  %v269 = vpop.f32.mrf.mxu0
  %v270 = vadd.f32 %v221, %v269
  %271 = vmatmul.bf16.gmra.mxu0 %v187
  %v272 = vpop.f32.mrf.mxu0
  %v273 = vadd.f32 %v224, %v272
  %v274 = vpop.f32.mrf.mxu0
  %v275 = vadd.f32 %v226, %v274
  %276 = vmatmul.bf16.gmra.mxu0 %v190
  %v277 = vpop.f32.mrf.mxu0
  %v278 = vadd.f32 %v229, %v277
  %v279 = vpop.f32.mrf.mxu0
  %v280 = vadd.f32 %v231, %v279
  %281 = vmatmul.bf16.gmra.mxu0 %v193
  %v282 = vpop.f32.mrf.mxu0
  %v283 = vadd.f32 %v234, %v282
  %v284 = vpop.f32.mrf.mxu0
  %v285 = vadd.f32 %v236, %v284
  %286 = vmatmul.bf16.gmra.mxu0 %v196
  %v287 = vpop.f32.mrf.mxu0
  %v288 = vadd.f32 %v239, %v287
  %v289 = vpop.f32.mrf.mxu0
  %v290 = vadd.f32 %v241, %v289
  %291 = vmatmul.bf16.gmra.mxu0 %v199
  %v292 = vpop.f32.mrf.mxu0
  %v293 = vadd.f32 %v244, %v292
  %v294 = vpop.f32.mrf.mxu0
  %v295 = vadd.f32 %v246, %v294
  %296 = vmatmul.bf16.gmra.mxu0 %v202
  %v297 = vpop.f32.mrf.mxu0
  %v298 = vadd.f32 %v249, %v297
  %v299 = vpop.f32.mrf.mxu0
  %v300 = vadd.f32 %v251, %v299
  %301 = vdwg.mxu0
  %v302 = vmax.f32 %v263, 0.0
  %v303 = vmax.f32 %v265, 0.0
  %v304 = vmax.f32 %v268, 0.0
  %v305 = vmax.f32 %v270, 0.0
  %v306 = vmax.f32 %v273, 0.0
  %v307 = vmax.f32 %v275, 0.0
  %v308 = vmax.f32 %v278, 0.0
  %v309 = vmax.f32 %v280, 0.0
  %v310 = vmax.f32 %v283, 0.0
  %v311 = vmax.f32 %v285, 0.0
  %v312 = vmax.f32 %v288, 0.0
  %v313 = vmax.f32 %v290, 0.0
  %v314 = vmax.f32 %v293, 0.0
  %v315 = vmax.f32 %v295, 0.0
  %v316 = vmax.f32 %v298, 0.0
  %v317 = vmax.f32 %v300, 0.0
  %v318 = vpack.c.bf16 %v302, %v302
  %v319 = vpack.c.bf16 %v303, %v303
  %v320 = vpack.c.bf16 %v304, %v304
  %v321 = vpack.c.bf16 %v305, %v305
  %v322 = vpack.c.bf16 %v306, %v306
  %v323 = vpack.c.bf16 %v307, %v307
  %v324 = vpack.c.bf16 %v308, %v308
  %v325 = vpack.c.bf16 %v309, %v309
  %v326 = vpack.c.bf16 %v310, %v310
  %v327 = vpack.c.bf16 %v311, %v311
  %v328 = vpack.c.bf16 %v312, %v312
  %v329 = vpack.c.bf16 %v313, %v313
  %v330 = vpack.c.bf16 %v314, %v314
  %v331 = vpack.c.bf16 %v315, %v315
  %v332 = vpack.c.bf16 %v316, %v316
  %v333 = vpack.c.bf16 %v317, %v317
  %vm334 = vcmask 191488
  %335 = vst.msk [vmem:[%s3] sm:$0xf] %vm334, %v318
  %336 = vst.msk [vmem:[%s3 + $0x4] sm:$0xf] %vm334, %v319
  %337 = vst.msk [vmem:[%s3 + $0x8] sm:$0xf] %vm334, %v320
  %338 = vst.msk [vmem:[%s3 + $0xc] sm:$0xf] %vm334, %v321
  %339 = vst.msk [vmem:[%s3 + $0x10] sm:$0xf] %vm334, %v322
  %340 = vst.msk [vmem:[%s3 + $0x14] sm:$0xf] %vm334, %v323
  %341 = vst.msk [vmem:[%s3 + $0x18] sm:$0xf] %vm334, %v324
  %342 = vst.msk [vmem:[%s3 + $0x1c] sm:$0xf] %vm334, %v325
  %343 = vst.msk [vmem:[%s3 + $0x20] sm:$0xf] %vm334, %v326
  %344 = vst.msk [vmem:[%s3 + $0x24] sm:$0xf] %vm334, %v327
  %345 = vst.msk [vmem:[%s3 + $0x28] sm:$0xf] %vm334, %v328
  %346 = vst.msk [vmem:[%s3 + $0x2c] sm:$0xf] %vm334, %v329
  %347 = vst.msk [vmem:[%s3 + $0x30] sm:$0xf] %vm334, %v330
  %348 = vst.msk [vmem:[%s3 + $0x34] sm:$0xf] %vm334, %v331
  %349 = vst.msk [vmem:[%s3 + $0x38] sm:$0xf] %vm334, %v332
  %350 = vst.msk [vmem:[%s3 + $0x3c] sm:$0xf] %vm334, %v333
  // Predicated region
  $region14: #{forward.4} parent=0 // pred_check
    _
  $region15: #{forward.4} parent=0 // pred_check_branch
    %352 = sbr.rel (0) target = $region17
  $region16: #{forward.4} parent=0 // pred_region
    _
  $region17: #{forward.4} parent=0 // pred_fallthru
    _
  // Predicated region
  $region18: #{forward.4} parent=0 // pred_check
    _
  $region19: #{forward.4} parent=0 // pred_check_branch
    %354 = sbr.rel (0) target = $region21
  $region20: #{forward.4} parent=0 // pred_region
    _
  $region21: #{forward.4} parent=0 // pred_fallthru
    _

// kernel: forward.5
$region0: #{forward.5}
  #allocation0 [shape = 'u32[]', space=smem, size = 0x4, offset = 0x4, fixed_abs, tag = 'smem constant byte address 0x4 - core index']
  #allocation1 [shape = 'u32[72,128]{1,0:T(1,128)}', space=vmem, size = 0x9000, scoped, tag = 'internal scratch']
  %s0 = inlined_call_operand.vmem [shape: bf16[2,1536], index: 0, kind: input, shape index: {}]
  %s1 = inlined_call_operand.vmem [shape: bf16[1536,64], index: 1, kind: input, shape index: {}]
  %s2 = inlined_call_operand.vmem [shape: bf16[1536,64], index: 2, kind: input, shape index: {}]
  %s3 = inlined_call_operand.vmem [shape: f32[1,64], index: 3, kind: input, shape index: {}]
  %s4 = inlined_call_operand.vmem [shape: bf16[64,64], index: 4, kind: input, shape index: {}]
  %s5 = inlined_call_operand.vmem [shape: bf16[64,64], index: 5, kind: input, shape index: {}]
  %s6 = inlined_call_operand.vmem [shape: f32[1,64], index: 6, kind: input, shape index: {}]
  %s7 = inlined_call_operand.vmem [shape: bf16[64,32], index: 7, kind: input, shape index: {}]
  %s8 = inlined_call_operand.vmem [shape: f32[1,32], index: 8, kind: input, shape index: {}]
  %s9 = inlined_call_operand.vmem [shape: bf16[32,2], index: 9, kind: input, shape index: {}]
  %s10 = inlined_call_operand.vmem [shape: f32[1,2], index: 10, kind: input, shape index: {}]
  %s11 = inlined_call_operand.hbm [shape: f32[2,2], index: 11, kind: output, shape index: {}]
  %s12 = sld [smem:[#allocation0]]
  $region54: #{forward.5} parent=0
    _
  %s14 = ssub.s32 1, %s12
  %s15 = scalar_select 0, %s14, %s12
  $region1: #{forward.5} parent=0
    #allocation2 [shape = 'u8[1024]{0}', space=vmem, size = 0x400, scoped, tag = 'output window, operand 0, single buffered']
    #allocation3 [shape = 's32[1]{0}', space=sflag, size = 0x4, scoped, tag = 'scoped memory for forward.5']
    %16 = vsyncpa [#allocation3], 0
    // Predicated region
    $region2: #{forward.5} parent=1 // pred_check
      _
    $region3: #{forward.5} parent=1 // pred_check_branch
      %18 = sbr.rel (0) target = $region5
    $region4: #{forward.5} parent=1 // pred_region
      _
    $region5: #{forward.5} parent=1 // pred_fallthru
      _
    // Predicated region
    $region6: #{forward.5} parent=1 // pred_check
      _
    $region7: #{forward.5} parent=1 // pred_check_branch
      %20 = sbr.rel (0) target = $region9
    $region8: #{forward.5} parent=1 // pred_region
      _
    $region9: #{forward.5} parent=1 // pred_fallthru
      _
    // Predicated region
    $region10: #{forward.5} parent=1 // pred_check
      _
    $region11: #{forward.5} parent=1 // pred_check_branch
      %22 = sbr.rel (0) target = $region13
    $region12: #{forward.5} parent=1 // pred_region
      _
    $region13: #{forward.5} parent=1 // pred_fallthru
      _
    // Predicated region
    $region14: #{forward.5} parent=1 // pred_check
      _
    $region15: #{forward.5} parent=1 // pred_check_branch
      %24 = sbr.rel (0) target = $region17
    $region16: #{forward.5} parent=1 // pred_region
      _
    $region17: #{forward.5} parent=1 // pred_fallthru
      _
    // Predicated region
    $region18: #{forward.5} parent=1 // pred_check
      _
    $region19: #{forward.5} parent=1 // pred_check_branch
      %26 = sbr.rel (0) target = $region21
    $region20: #{forward.5} parent=1 // pred_region
      _
    $region21: #{forward.5} parent=1 // pred_fallthru
      _
    // Predicated region
    $region22: #{forward.5} parent=1 // pred_check
      _
    $region23: #{forward.5} parent=1 // pred_check_branch
      %28 = sbr.rel (0) target = $region25
    $region24: #{forward.5} parent=1 // pred_region
      _
    $region25: #{forward.5} parent=1 // pred_fallthru
      _
    // Predicated region
    $region26: #{forward.5} parent=1 // pred_check
      _
    $region27: #{forward.5} parent=1 // pred_check_branch
      %30 = sbr.rel (0) target = $region29
    $region28: #{forward.5} parent=1 // pred_region
      _
    $region29: #{forward.5} parent=1 // pred_fallthru
      _
    // Predicated region
    $region30: #{forward.5} parent=1 // pred_check
      _
    $region31: #{forward.5} parent=1 // pred_check_branch
      %32 = sbr.rel (0) target = $region33
    $region32: #{forward.5} parent=1 // pred_region
      _
    $region33: #{forward.5} parent=1 // pred_fallthru
      _
    // Predicated region
    $region34: #{forward.5} parent=1 // pred_check
      _
    $region35: #{forward.5} parent=1 // pred_check_branch
      %34 = sbr.rel (0) target = $region37
    $region36: #{forward.5} parent=1 // pred_region
      _
    $region37: #{forward.5} parent=1 // pred_fallthru
      _
    // Predicated region
    $region38: #{forward.5} parent=1 // pred_check
      _
    $region39: #{forward.5} parent=1 // pred_check_branch
      %36 = sbr.rel (0) target = $region41
    $region40: #{forward.5} parent=1 // pred_region
      _
    $region41: #{forward.5} parent=1 // pred_fallthru
      _
    // Predicated region
    $region42: #{forward.5} parent=1 // pred_check
      _
    $region43: #{forward.5} parent=1 // pred_check_branch
      %38 = sbr.rel (0) target = $region45
    $region44: #{forward.5} parent=1 // pred_region
      _
    $region45: #{forward.5} parent=1 // pred_fallthru
      _
    %v40 = vld [vmem:[%s0] sm:$0xff]
    %v41 = vld [vmem:[%s0 + $0x8] sm:$0xf]
    %v42 = vld [vmem:[%s1] sm:$0xf]
    %v43 = vld [vmem:[%s1 + $0x4] sm:$0xf]
    %v44 = vld [vmem:[%s1 + $0x8] sm:$0xf]
    %v45 = vld [vmem:[%s1 + $0xc] sm:$0xf]
    %v46 = vld [vmem:[%s1 + $0x10] sm:$0xf]
    %v47 = vld [vmem:[%s1 + $0x14] sm:$0xf]
    %v48 = vld [vmem:[%s1 + $0x18] sm:$0xf]
    %v49 = vld [vmem:[%s1 + $0x1c] sm:$0xf]
    %v50 = vld [vmem:[%s1 + $0x20] sm:$0xf]
    %v51 = vld [vmem:[%s1 + $0x24] sm:$0xf]
    %v52 = vld [vmem:[%s1 + $0x28] sm:$0xf]
    %v53 = vld [vmem:[%s1 + $0x2c] sm:$0xf]
    %v54 = vld [vmem:[%s1 + $0x30] sm:$0xf]
    %v55 = vld [vmem:[%s1 + $0x34] sm:$0xf]
    %v56 = vld [vmem:[%s1 + $0x38] sm:$0xf]
    %v57 = vld [vmem:[%s1 + $0x3c] sm:$0xf]
    %v58 = vld [vmem:[%s1 + $0x40] sm:$0xf]
    %v59 = vld [vmem:[%s1 + $0x44] sm:$0xf]
    %v60 = vld [vmem:[%s1 + $0x48] sm:$0xf]
    %v61 = vld [vmem:[%s1 + $0x4c] sm:$0xf]
    %v62 = vld [vmem:[%s1 + $0x50] sm:$0xf]
    %v63 = vld [vmem:[%s1 + $0x54] sm:$0xf]
    %v64 = vld [vmem:[%s1 + $0x58] sm:$0xf]
    %v65 = vld [vmem:[%s1 + $0x5c] sm:$0xf]
    %v66 = vld [vmem:[%s1 + $0x60] sm:$0xf]
    %v67 = vld [vmem:[%s1 + $0x64] sm:$0xf]
    %v68 = vld [vmem:[%s1 + $0x68] sm:$0xf]
    %v69 = vld [vmem:[%s1 + $0x6c] sm:$0xf]
    %v70 = vld [vmem:[%s1 + $0x70] sm:$0xf]
    %v71 = vld [vmem:[%s1 + $0x74] sm:$0xf]
    %v72 = vld [vmem:[%s1 + $0x78] sm:$0xf]
    %v73 = vld [vmem:[%s1 + $0x7c] sm:$0xf]
    %v74 = vld [vmem:[%s1 + $0x80] sm:$0xf]
    %v75 = vld [vmem:[%s1 + $0x84] sm:$0xf]
    %v76 = vld [vmem:[%s1 + $0x88] sm:$0xf]
    %v77 = vld [vmem:[%s1 + $0x8c] sm:$0xf]
    %v78 = vld [vmem:[%s1 + $0x90] sm:$0xf]
    %v79 = vld [vmem:[%s1 + $0x94] sm:$0xf]
    %v80 = vld [vmem:[%s1 + $0x98] sm:$0xf]
    %v81 = vld [vmem:[%s1 + $0x9c] sm:$0xf]
    %v82 = vld [vmem:[%s1 + $0xa0] sm:$0xf]
    %v83 = vld [vmem:[%s1 + $0xa4] sm:$0xf]
    %v84 = vld [vmem:[%s1 + $0xa8] sm:$0xf]
    %v85 = vld [vmem:[%s1 + $0xac] sm:$0xf]
    %v86 = vld [vmem:[%s1 + $0xb0] sm:$0xf]
    %v87 = vld [vmem:[%s1 + $0xb4] sm:$0xf]
    %v88 = vld [vmem:[%s1 + $0xb8] sm:$0xf]
    %v89 = vld [vmem:[%s1 + $0xbc] sm:$0xf]
    %v90 = vld [vmem:[%s1 + $0xc0] sm:$0xf]
    %v91 = vld [vmem:[%s1 + $0xc4] sm:$0xf]
    %v92 = vld [vmem:[%s1 + $0xc8] sm:$0xf]
    %v93 = vld [vmem:[%s1 + $0xcc] sm:$0xf]
    %v94 = vld [vmem:[%s1 + $0xd0] sm:$0xf]
    %v95 = vld [vmem:[%s1 + $0xd4] sm:$0xf]
    %v96 = vld [vmem:[%s1 + $0xd8] sm:$0xf]
    %v97 = vld [vmem:[%s1 + $0xdc] sm:$0xf]
    %v98 = vld [vmem:[%s1 + $0xe0] sm:$0xf]
    %v99 = vld [vmem:[%s1 + $0xe4] sm:$0xf]
    %v100 = vld [vmem:[%s1 + $0xe8] sm:$0xf]
    %v101 = vld [vmem:[%s1 + $0xec] sm:$0xf]
    %v102 = vld [vmem:[%s1 + $0xf0] sm:$0xf]
    %v103 = vld [vmem:[%s1 + $0xf4] sm:$0xf]
    %v104 = vld [vmem:[%s1 + $0xf8] sm:$0xf]
    %v105 = vld [vmem:[%s1 + $0xfc] sm:$0xf]
    %v106 = vld [vmem:[%s1 + $0x100] sm:$0xf]
    %v107 = vld [vmem:[%s1 + $0x104] sm:$0xf]
    %v108 = vld [vmem:[%s1 + $0x108] sm:$0xf]
    %v109 = vld [vmem:[%s1 + $0x10c] sm:$0xf]
    %v110 = vld [vmem:[%s1 + $0x110] sm:$0xf]
    %v111 = vld [vmem:[%s1 + $0x114] sm:$0xf]
    %v112 = vld [vmem:[%s1 + $0x118] sm:$0xf]
    %v113 = vld [vmem:[%s1 + $0x11c] sm:$0xf]
    %v114 = vld [vmem:[%s1 + $0x120] sm:$0xf]
    %v115 = vld [vmem:[%s1 + $0x124] sm:$0xf]
    %v116 = vld [vmem:[%s1 + $0x128] sm:$0xf]
    %v117 = vld [vmem:[%s1 + $0x12c] sm:$0xf]
    %v118 = vld [vmem:[%s1 + $0x130] sm:$0xf]
    %v119 = vld [vmem:[%s1 + $0x134] sm:$0xf]
    %v120 = vld [vmem:[%s1 + $0x138] sm:$0xf]
    %v121 = vld [vmem:[%s1 + $0x13c] sm:$0xf]
    %v122 = vld [vmem:[%s1 + $0x140] sm:$0xf]
    %v123 = vld [vmem:[%s1 + $0x144] sm:$0xf]
    %v124 = vld [vmem:[%s1 + $0x148] sm:$0xf]
    %v125 = vld [vmem:[%s1 + $0x14c] sm:$0xf]
    %v126 = vld [vmem:[%s1 + $0x150] sm:$0xf]
    %v127 = vld [vmem:[%s1 + $0x154] sm:$0xf]
    %v128 = vld [vmem:[%s1 + $0x158] sm:$0xf]
    %v129 = vld [vmem:[%s1 + $0x15c] sm:$0xf]
    %v130 = vld [vmem:[%s1 + $0x160] sm:$0xf]
    %v131 = vld [vmem:[%s1 + $0x164] sm:$0xf]
    %v132 = vld [vmem:[%s1 + $0x168] sm:$0xf]
    %v133 = vld [vmem:[%s1 + $0x16c] sm:$0xf]
    %v134 = vld [vmem:[%s1 + $0x170] sm:$0xf]
    %v135 = vld [vmem:[%s1 + $0x174] sm:$0xf]
    %v136 = vld [vmem:[%s1 + $0x178] sm:$0xf]
    %v137 = vld [vmem:[%s1 + $0x17c] sm:$0xf]
    %v138 = vld [vmem:[%s1 + $0x180] sm:$0xf]
    %v139 = vld [vmem:[%s1 + $0x184] sm:$0xf]
    %v140 = vld [vmem:[%s1 + $0x188] sm:$0xf]
    %v141 = vld [vmem:[%s1 + $0x18c] sm:$0xf]
    %v142 = vld [vmem:[%s1 + $0x190] sm:$0xf]
    %v143 = vld [vmem:[%s1 + $0x194] sm:$0xf]
    %v144 = vld [vmem:[%s1 + $0x198] sm:$0xf]
    %v145 = vld [vmem:[%s1 + $0x19c] sm:$0xf]
    %v146 = vld [vmem:[%s1 + $0x1a0] sm:$0xf]
    %v147 = vld [vmem:[%s1 + $0x1a4] sm:$0xf]
    %v148 = vld [vmem:[%s1 + $0x1a8] sm:$0xf]
    %v149 = vld [vmem:[%s1 + $0x1ac] sm:$0xf]
    %v150 = vld [vmem:[%s1 + $0x1b0] sm:$0xf]
    %v151 = vld [vmem:[%s1 + $0x1b4] sm:$0xf]
    %v152 = vld [vmem:[%s1 + $0x1b8] sm:$0xf]
    %v153 = vld [vmem:[%s1 + $0x1bc] sm:$0xf]
    %v154 = vld [vmem:[%s1 + $0x1c0] sm:$0xf]
    %v155 = vld [vmem:[%s1 + $0x1c4] sm:$0xf]
    %v156 = vld [vmem:[%s1 + $0x1c8] sm:$0xf]
    %v157 = vld [vmem:[%s1 + $0x1cc] sm:$0xf]
    %v158 = vld [vmem:[%s1 + $0x1d0] sm:$0xf]
    %v159 = vld [vmem:[%s1 + $0x1d4] sm:$0xf]
    %v160 = vld [vmem:[%s1 + $0x1d8] sm:$0xf]
    %v161 = vld [vmem:[%s1 + $0x1dc] sm:$0xf]
    %v162 = vld [vmem:[%s1 + $0x1e0] sm:$0xf]
    %v163 = vld [vmem:[%s1 + $0x1e4] sm:$0xf]
    %v164 = vld [vmem:[%s1 + $0x1e8] sm:$0xf]
    %v165 = vld [vmem:[%s1 + $0x1ec] sm:$0xf]
    %v166 = vld [vmem:[%s1 + $0x1f0] sm:$0xf]
    %v167 = vld [vmem:[%s1 + $0x1f4] sm:$0xf]
    %v168 = vld [vmem:[%s1 + $0x1f8] sm:$0xf]
    %v169 = vld [vmem:[%s1 + $0x1fc] sm:$0xf]
    %v170 = vld [vmem:[%s1 + $0x200] sm:$0xf]
    %v171 = vld [vmem:[%s1 + $0x204] sm:$0xf]
    %v172 = vld [vmem:[%s1 + $0x208] sm:$0xf]
    %v173 = vld [vmem:[%s1 + $0x20c] sm:$0xf]
    %v174 = vld [vmem:[%s1 + $0x210] sm:$0xf]
    %v175 = vld [vmem:[%s1 + $0x214] sm:$0xf]
    %v176 = vld [vmem:[%s1 + $0x218] sm:$0xf]
    %v177 = vld [vmem:[%s1 + $0x21c] sm:$0xf]
    %v178 = vld [vmem:[%s1 + $0x220] sm:$0xf]
    %v179 = vld [vmem:[%s1 + $0x224] sm:$0xf]
    %v180 = vld [vmem:[%s1 + $0x228] sm:$0xf]
    %v181 = vld [vmem:[%s1 + $0x22c] sm:$0xf]
    %v182 = vld [vmem:[%s1 + $0x230] sm:$0xf]
    %v183 = vld [vmem:[%s1 + $0x234] sm:$0xf]
    %v184 = vld [vmem:[%s1 + $0x238] sm:$0xf]
    %v185 = vld [vmem:[%s1 + $0x23c] sm:$0xf]
    %v186 = vld [vmem:[%s1 + $0x240] sm:$0xf]
    %v187 = vld [vmem:[%s1 + $0x244] sm:$0xf]
    %v188 = vld [vmem:[%s1 + $0x248] sm:$0xf]
    %v189 = vld [vmem:[%s1 + $0x24c] sm:$0xf]
    %v190 = vld [vmem:[%s1 + $0x250] sm:$0xf]
    %v191 = vld [vmem:[%s1 + $0x254] sm:$0xf]
    %v192 = vld [vmem:[%s1 + $0x258] sm:$0xf]
    %v193 = vld [vmem:[%s1 + $0x25c] sm:$0xf]
    %v194 = vld [vmem:[%s1 + $0x260] sm:$0xf]
    %v195 = vld [vmem:[%s1 + $0x264] sm:$0xf]
    %v196 = vld [vmem:[%s1 + $0x268] sm:$0xf]
    %v197 = vld [vmem:[%s1 + $0x26c] sm:$0xf]
    %v198 = vld [vmem:[%s1 + $0x270] sm:$0xf]
    %v199 = vld [vmem:[%s1 + $0x274] sm:$0xf]
    %v200 = vld [vmem:[%s1 + $0x278] sm:$0xf]
    %v201 = vld [vmem:[%s1 + $0x27c] sm:$0xf]
    %v202 = vld [vmem:[%s1 + $0x280] sm:$0xf]
    %v203 = vld [vmem:[%s1 + $0x284] sm:$0xf]
    %v204 = vld [vmem:[%s1 + $0x288] sm:$0xf]
    %v205 = vld [vmem:[%s1 + $0x28c] sm:$0xf]
    %v206 = vld [vmem:[%s1 + $0x290] sm:$0xf]
    %v207 = vld [vmem:[%s1 + $0x294] sm:$0xf]
    %v208 = vld [vmem:[%s1 + $0x298] sm:$0xf]
    %v209 = vld [vmem:[%s1 + $0x29c] sm:$0xf]
    %v210 = vld [vmem:[%s1 + $0x2a0] sm:$0xf]
    %v211 = vld [vmem:[%s1 + $0x2a4] sm:$0xf]
    %v212 = vld [vmem:[%s1 + $0x2a8] sm:$0xf]
    %v213 = vld [vmem:[%s1 + $0x2ac] sm:$0xf]
    %v214 = vld [vmem:[%s1 + $0x2b0] sm:$0xf]
    %v215 = vld [vmem:[%s1 + $0x2b4] sm:$0xf]
    %v216 = vld [vmem:[%s1 + $0x2b8] sm:$0xf]
    %v217 = vld [vmem:[%s1 + $0x2bc] sm:$0xf]
    %v218 = vld [vmem:[%s1 + $0x2c0] sm:$0xf]
    %v219 = vld [vmem:[%s1 + $0x2c4] sm:$0xf]
    %v220 = vld [vmem:[%s1 + $0x2c8] sm:$0xf]
    %v221 = vld [vmem:[%s1 + $0x2cc] sm:$0xf]
    %v222 = vld [vmem:[%s1 + $0x2d0] sm:$0xf]
    %v223 = vld [vmem:[%s1 + $0x2d4] sm:$0xf]
    %v224 = vld [vmem:[%s1 + $0x2d8] sm:$0xf]
    %v225 = vld [vmem:[%s1 + $0x2dc] sm:$0xf]
    %v226 = vld [vmem:[%s1 + $0x2e0] sm:$0xf]
    %v227 = vld [vmem:[%s1 + $0x2e4] sm:$0xf]
    %v228 = vld [vmem:[%s1 + $0x2e8] sm:$0xf]
    %v229 = vld [vmem:[%s1 + $0x2ec] sm:$0xf]
    %v230 = vld [vmem:[%s1 + $0x2f0] sm:$0xf]
    %v231 = vld [vmem:[%s1 + $0x2f4] sm:$0xf]
    %v232 = vld [vmem:[%s1 + $0x2f8] sm:$0xf]
    %v233 = vld [vmem:[%s1 + $0x2fc] sm:$0xf]
    %235 = vst [vmem:[#allocation1] ss:$9 sm:$0xff] %v40
    %v236 = vld [vmem:[#allocation1] sm:$0xff]
    %v237 = vld [vmem:[#allocation1 + $0x9] sm:$0xff]
    %v238 = vld [vmem:[#allocation1 + $0x12] sm:$0xff]
    %v239 = vld [vmem:[#allocation1 + $0x1b] sm:$0xff]
    %v240 = vld [vmem:[#allocation1 + $0x24] sm:$0xff]
    %v241 = vld [vmem:[#allocation1 + $0x2d] sm:$0xff]
    %v242 = vld [vmem:[#allocation1 + $0x36] sm:$0xff]
    %v243 = vld [vmem:[#allocation1 + $0x3f] sm:$0xff]
    %245 = vst [vmem:[#allocation1] ss:$9 sm:$0xff] %v41
    %v246 = vld [vmem:[#allocation1] sm:$0xff]
    %v247 = vld [vmem:[#allocation1 + $0x9] sm:$0xff]
    %v248 = vld [vmem:[#allocation1 + $0x12] sm:$0xff]
    %v249 = vld [vmem:[#allocation1 + $0x1b] sm:$0xff]
    %v454 = vunpack.c.l.b16 %v42
    %v455 = vunpack.c.l.b16 %v43
    %v456 = vunpack.c.l.b16 %v44
    %v457 = vunpack.c.l.b16 %v45
    %v458 = vunpack.c.l.b16 %v46
    %v459 = vunpack.c.l.b16 %v47
    %v460 = vunpack.c.l.b16 %v48
    %v461 = vunpack.c.l.b16 %v49
    %v462 = vunpack.c.l.b16 %v50
    %v463 = vunpack.c.l.b16 %v51
    %v464 = vunpack.c.l.b16 %v52
    %v465 = vunpack.c.l.b16 %v53
    %v466 = vunpack.c.l.b16 %v54
    %v467 = vunpack.c.l.b16 %v55
    %v468 = vunpack.c.l.b16 %v56
    %v469 = vunpack.c.l.b16 %v57
    %v470 = vunpack.c.l.b16 %v58
    %v471 = vunpack.c.l.b16 %v59
    %v472 = vunpack.c.l.b16 %v60
    %v473 = vunpack.c.l.b16 %v61
    %v474 = vunpack.c.l.b16 %v62
    %v475 = vunpack.c.l.b16 %v63
    %v476 = vunpack.c.l.b16 %v64
    %v477 = vunpack.c.l.b16 %v65
    %v478 = vunpack.c.l.b16 %v66
    %v479 = vunpack.c.l.b16 %v67
    %v480 = vunpack.c.l.b16 %v68
    %v481 = vunpack.c.l.b16 %v69
    %v482 = vunpack.c.l.b16 %v70
    %v483 = vunpack.c.l.b16 %v71
    %v484 = vunpack.c.l.b16 %v72
    %v485 = vunpack.c.l.b16 %v73
    %v486 = vunpack.c.l.b16 %v74
    %v487 = vunpack.c.l.b16 %v75
    %v488 = vunpack.c.l.b16 %v76
    %v489 = vunpack.c.l.b16 %v77
    %v490 = vunpack.c.l.b16 %v78
    %v491 = vunpack.c.l.b16 %v79
    %v492 = vunpack.c.l.b16 %v80
    %v493 = vunpack.c.l.b16 %v81
    %v494 = vunpack.c.l.b16 %v82
    %v495 = vunpack.c.l.b16 %v83
    %v496 = vunpack.c.l.b16 %v84
    %v497 = vunpack.c.l.b16 %v85
    %v498 = vunpack.c.l.b16 %v86
    %v499 = vunpack.c.l.b16 %v87
    %v500 = vunpack.c.l.b16 %v88
    %v501 = vunpack.c.l.b16 %v89
    %v502 = vunpack.c.l.b16 %v90
    %v503 = vunpack.c.l.b16 %v91
    %v504 = vunpack.c.l.b16 %v92
    %v505 = vunpack.c.l.b16 %v93
    %v506 = vunpack.c.l.b16 %v94
    %v507 = vunpack.c.l.b16 %v95
    %v508 = vunpack.c.l.b16 %v96
    %v509 = vunpack.c.l.b16 %v97
    %v510 = vunpack.c.l.b16 %v98
    %v511 = vunpack.c.l.b16 %v99
    %v512 = vunpack.c.l.b16 %v100
    %v513 = vunpack.c.l.b16 %v101
    %v514 = vunpack.c.l.b16 %v102
    %v515 = vunpack.c.l.b16 %v103
    %v516 = vunpack.c.l.b16 %v104
    %v517 = vunpack.c.l.b16 %v105
    %v518 = vunpack.c.l.b16 %v106
    %v519 = vunpack.c.l.b16 %v107
    %v520 = vunpack.c.l.b16 %v108
    %v521 = vunpack.c.l.b16 %v109
    %v522 = vunpack.c.l.b16 %v110
    %v523 = vunpack.c.l.b16 %v111
    %v524 = vunpack.c.l.b16 %v112
    %v525 = vunpack.c.l.b16 %v113
    %v526 = vunpack.c.l.b16 %v114
    %v527 = vunpack.c.l.b16 %v115
    %v528 = vunpack.c.l.b16 %v116
    %v529 = vunpack.c.l.b16 %v117
    %v530 = vunpack.c.l.b16 %v118
    %v531 = vunpack.c.l.b16 %v119
    %v532 = vunpack.c.l.b16 %v120
    %v533 = vunpack.c.l.b16 %v121
    %v534 = vunpack.c.l.b16 %v122
    %v535 = vunpack.c.l.b16 %v123
    %v536 = vunpack.c.l.b16 %v124
    %v537 = vunpack.c.l.b16 %v125
    %v538 = vunpack.c.l.b16 %v126
    %v539 = vunpack.c.l.b16 %v127
    %v540 = vunpack.c.l.b16 %v128
    %v541 = vunpack.c.l.b16 %v129
    %v542 = vunpack.c.l.b16 %v130
    %v543 = vunpack.c.l.b16 %v131
    %v544 = vunpack.c.l.b16 %v132
    %v545 = vunpack.c.l.b16 %v133
    %v546 = vunpack.c.l.b16 %v134
    %v547 = vunpack.c.l.b16 %v135
    %v548 = vunpack.c.l.b16 %v136
    %v549 = vunpack.c.l.b16 %v137
    %v550 = vunpack.c.l.b16 %v138
    %v551 = vunpack.c.l.b16 %v139
    %v552 = vunpack.c.l.b16 %v140
    %v553 = vunpack.c.l.b16 %v141
    %v554 = vunpack.c.l.b16 %v142
    %v555 = vunpack.c.l.b16 %v143
    %v556 = vunpack.c.l.b16 %v144
    %v557 = vunpack.c.l.b16 %v145
    %v558 = vunpack.c.l.b16 %v146
    %v559 = vunpack.c.l.b16 %v147
    %v560 = vunpack.c.l.b16 %v148
    %v561 = vunpack.c.l.b16 %v149
    %v562 = vunpack.c.l.b16 %v150
    %v563 = vunpack.c.l.b16 %v151
    %v564 = vunpack.c.l.b16 %v152
    %v565 = vunpack.c.l.b16 %v153
    %v566 = vunpack.c.l.b16 %v154
    %v567 = vunpack.c.l.b16 %v155
    %v568 = vunpack.c.l.b16 %v156
    %v569 = vunpack.c.l.b16 %v157
    %v570 = vunpack.c.l.b16 %v158
    %v571 = vunpack.c.l.b16 %v159
    %v572 = vunpack.c.l.b16 %v160
    %v573 = vunpack.c.l.b16 %v161
    %v574 = vunpack.c.l.b16 %v162
    %v575 = vunpack.c.l.b16 %v163
    %v576 = vunpack.c.l.b16 %v164
    %v577 = vunpack.c.l.b16 %v165
    %v578 = vunpack.c.l.b16 %v166
    %v579 = vunpack.c.l.b16 %v167
    %v580 = vunpack.c.l.b16 %v168
    %v581 = vunpack.c.l.b16 %v169
    %v582 = vunpack.c.l.b16 %v170
    %v583 = vunpack.c.l.b16 %v171
    %v584 = vunpack.c.l.b16 %v172
    %v585 = vunpack.c.l.b16 %v173
    %v586 = vunpack.c.l.b16 %v174
    %v587 = vunpack.c.l.b16 %v175
    %v588 = vunpack.c.l.b16 %v176
    %v589 = vunpack.c.l.b16 %v177
    %v590 = vunpack.c.l.b16 %v178
    %v591 = vunpack.c.l.b16 %v179
    %v592 = vunpack.c.l.b16 %v180
    %v593 = vunpack.c.l.b16 %v181
    %v594 = vunpack.c.l.b16 %v182
    %v595 = vunpack.c.l.b16 %v183
    %v596 = vunpack.c.l.b16 %v184
    %v597 = vunpack.c.l.b16 %v185
    %v598 = vunpack.c.l.b16 %v186
    %v599 = vunpack.c.l.b16 %v187
    %v600 = vunpack.c.l.b16 %v188
    %v601 = vunpack.c.l.b16 %v189
    %v602 = vunpack.c.l.b16 %v190
    %v603 = vunpack.c.l.b16 %v191
    %v604 = vunpack.c.l.b16 %v192
    %v605 = vunpack.c.l.b16 %v193
    %v606 = vunpack.c.l.b16 %v194
    %v607 = vunpack.c.l.b16 %v195
    %v608 = vunpack.c.l.b16 %v196
    %v609 = vunpack.c.l.b16 %v197
    %v610 = vunpack.c.l.b16 %v198
    %v611 = vunpack.c.l.b16 %v199
    %v612 = vunpack.c.l.b16 %v200
    %v613 = vunpack.c.l.b16 %v201
    %v614 = vunpack.c.l.b16 %v202
    %v615 = vunpack.c.l.b16 %v203
    %v616 = vunpack.c.l.b16 %v204
    %v617 = vunpack.c.l.b16 %v205
    %v618 = vunpack.c.l.b16 %v206
    %v619 = vunpack.c.l.b16 %v207
    %v620 = vunpack.c.l.b16 %v208
    %v621 = vunpack.c.l.b16 %v209
    %v622 = vunpack.c.l.b16 %v210
    %v623 = vunpack.c.l.b16 %v211
    %v624 = vunpack.c.l.b16 %v212
    %v625 = vunpack.c.l.b16 %v213
    %v626 = vunpack.c.l.b16 %v214
    %v627 = vunpack.c.l.b16 %v215
    %v628 = vunpack.c.l.b16 %v216
    %v629 = vunpack.c.l.b16 %v217
    %v630 = vunpack.c.l.b16 %v218
    %v631 = vunpack.c.l.b16 %v219
    %v632 = vunpack.c.l.b16 %v220
    %v633 = vunpack.c.l.b16 %v221
    %v634 = vunpack.c.l.b16 %v222
    %v635 = vunpack.c.l.b16 %v223
    %v636 = vunpack.c.l.b16 %v224
    %v637 = vunpack.c.l.b16 %v225
    %v638 = vunpack.c.l.b16 %v226
    %v639 = vunpack.c.l.b16 %v227
    %v640 = vunpack.c.l.b16 %v228
    %v641 = vunpack.c.l.b16 %v229
    %v642 = vunpack.c.l.b16 %v230
    %v643 = vunpack.c.l.b16 %v231
    %v644 = vunpack.c.l.b16 %v232
    %v645 = vunpack.c.l.b16 %v233
    %v646 = vpack.c.b16 %v455, %v454
    %v647 = vpack.c.b16 %v457, %v456
    %v648 = vpack.c.b16 %v459, %v458
    %v649 = vpack.c.b16 %v461, %v460
    %v650 = vpack.c.b16 %v463, %v462
    %v651 = vpack.c.b16 %v465, %v464
    %v652 = vpack.c.b16 %v467, %v466
    %v653 = vpack.c.b16 %v469, %v468
    %v654 = vpack.c.b16 %v471, %v470
    %v655 = vpack.c.b16 %v473, %v472
    %v656 = vpack.c.b16 %v475, %v474
    %v657 = vpack.c.b16 %v477, %v476
    %v658 = vpack.c.b16 %v479, %v478
    %v659 = vpack.c.b16 %v481, %v480
    %v660 = vpack.c.b16 %v483, %v482
    %v661 = vpack.c.b16 %v485, %v484
    %v662 = vpack.c.b16 %v487, %v486
    %v663 = vpack.c.b16 %v489, %v488
    %v664 = vpack.c.b16 %v491, %v490
    %v665 = vpack.c.b16 %v493, %v492
    %v666 = vpack.c.b16 %v495, %v494
    %v667 = vpack.c.b16 %v497, %v496
    %v668 = vpack.c.b16 %v499, %v498
    %v669 = vpack.c.b16 %v501, %v500
    %v670 = vpack.c.b16 %v503, %v502
    %v671 = vpack.c.b16 %v505, %v504
    %v672 = vpack.c.b16 %v507, %v506
    %v673 = vpack.c.b16 %v509, %v508
    %v674 = vpack.c.b16 %v511, %v510
    %v675 = vpack.c.b16 %v513, %v512
    %v676 = vpack.c.b16 %v515, %v514
    %v677 = vpack.c.b16 %v517, %v516
    %v678 = vpack.c.b16 %v519, %v518
    %v679 = vpack.c.b16 %v521, %v520
    %v680 = vpack.c.b16 %v523, %v522
    %v681 = vpack.c.b16 %v525, %v524
    %v682 = vpack.c.b16 %v527, %v526
    %v683 = vpack.c.b16 %v529, %v528
    %v684 = vpack.c.b16 %v531, %v530
    %v685 = vpack.c.b16 %v533, %v532
    %v686 = vpack.c.b16 %v535, %v534
    %v687 = vpack.c.b16 %v537, %v536
    %v688 = vpack.c.b16 %v539, %v538
    %v689 = vpack.c.b16 %v541, %v540
    %v690 = vpack.c.b16 %v543, %v542
    %v691 = vpack.c.b16 %v545, %v544
    %v692 = vpack.c.b16 %v547, %v546
    %v693 = vpack.c.b16 %v549, %v548
    %v694 = vpack.c.b16 %v551, %v550
    %v695 = vpack.c.b16 %v553, %v552
    %v696 = vpack.c.b16 %v555, %v554
    %v697 = vpack.c.b16 %v557, %v556
    %v698 = vpack.c.b16 %v559, %v558
    %v699 = vpack.c.b16 %v561, %v560
    %v700 = vpack.c.b16 %v563, %v562
    %v701 = vpack.c.b16 %v565, %v564
    %v702 = vpack.c.b16 %v567, %v566
    %v703 = vpack.c.b16 %v569, %v568
    %v704 = vpack.c.b16 %v571, %v570
    %v705 = vpack.c.b16 %v573, %v572
    %v706 = vpack.c.b16 %v575, %v574
    %v707 = vpack.c.b16 %v577, %v576
    %v708 = vpack.c.b16 %v579, %v578
    %v709 = vpack.c.b16 %v581, %v580
    %v710 = vpack.c.b16 %v583, %v582
    %v711 = vpack.c.b16 %v585, %v584
    %v712 = vpack.c.b16 %v587, %v586
    %v713 = vpack.c.b16 %v589, %v588
    %v714 = vpack.c.b16 %v591, %v590
    %v715 = vpack.c.b16 %v593, %v592
    %v716 = vpack.c.b16 %v595, %v594
    %v717 = vpack.c.b16 %v597, %v596
    %v718 = vpack.c.b16 %v599, %v598
    %v719 = vpack.c.b16 %v601, %v600
    %v720 = vpack.c.b16 %v603, %v602
    %v721 = vpack.c.b16 %v605, %v604
    %v722 = vpack.c.b16 %v607, %v606
    %v723 = vpack.c.b16 %v609, %v608
    %v724 = vpack.c.b16 %v611, %v610
    %v725 = vpack.c.b16 %v613, %v612
    %v726 = vpack.c.b16 %v615, %v614
    %v727 = vpack.c.b16 %v617, %v616
    %v728 = vpack.c.b16 %v619, %v618
    %v729 = vpack.c.b16 %v621, %v620
    %v730 = vpack.c.b16 %v623, %v622
    %v731 = vpack.c.b16 %v625, %v624
    %v732 = vpack.c.b16 %v627, %v626
    %v733 = vpack.c.b16 %v629, %v628
    %v734 = vpack.c.b16 %v631, %v630
    %v735 = vpack.c.b16 %v633, %v632
    %v736 = vpack.c.b16 %v635, %v634
    %v737 = vpack.c.b16 %v637, %v636
    %v738 = vpack.c.b16 %v639, %v638
    %v739 = vpack.c.b16 %v641, %v640
    %v740 = vpack.c.b16 %v643, %v642
    %v741 = vpack.c.b16 %v645, %v644
    %838 = vmatpush.bf16.msra.mxu0 %v653
    %839 = vmatpush.bf16.msra.mxu0 %v652
    %840 = vmatpush.bf16.msra.mxu0 %v651
    %841 = vmatpush.bf16.msra.mxu0 %v650
    %842 = vmatpush.bf16.msra.mxu0 %v649
    %843 = vmatpush.bf16.msra.mxu0 %v648
    %844 = vmatpush.bf16.msra.mxu0 %v647
    %845 = vmatpush.bf16.msra.mxu0 %v646
    %846 = vmatmul.bf16.gmra.mxu0 %v236
    %v847 = vpop.f32.mrf.mxu0
    %v848 = vadd.f32 0.0, %v847
    %v849 = vpop.f32.mrf.mxu0
    %850 = vdwg.mxu0
    %851 = vmatpush.bf16.msra.mxu0 %v661
    %852 = vmatpush.bf16.msra.mxu0 %v660
    %853 = vmatpush.bf16.msra.mxu0 %v659
    %854 = vmatpush.bf16.msra.mxu0 %v658
    %855 = vmatpush.bf16.msra.mxu0 %v657
    %856 = vmatpush.bf16.msra.mxu0 %v656
    %857 = vmatpush.bf16.msra.mxu0 %v655
    %858 = vmatpush.bf16.msra.mxu0 %v654
    %859 = vmatmul.bf16.gmra.mxu0 %v237
    %v860 = vpop.f32.mrf.mxu0
    %v861 = vadd.f32 %v848, %v860
    %v862 = vpop.f32.mrf.mxu0
    %863 = vdwg.mxu0
    %864 = vmatpush.bf16.msra.mxu0 %v669
    %865 = vmatpush.bf16.msra.mxu0 %v668
    %866 = vmatpush.bf16.msra.mxu0 %v667
    %867 = vmatpush.bf16.msra.mxu0 %v666
    %868 = vmatpush.bf16.msra.mxu0 %v665
    %869 = vmatpush.bf16.msra.mxu0 %v664
    %870 = vmatpush.bf16.msra.mxu0 %v663
    %871 = vmatpush.bf16.msra.mxu0 %v662
    %872 = vmatmul.bf16.gmra.mxu0 %v238
    %v873 = vpop.f32.mrf.mxu0
    %v874 = vadd.f32 %v861, %v873
    %v875 = vpop.f32.mrf.mxu0
    %876 = vdwg.mxu0
    %877 = vmatpush.bf16.msra.mxu0 %v677
    %878 = vmatpush.bf16.msra.mxu0 %v676
    %879 = vmatpush.bf16.msra.mxu0 %v675
    %880 = vmatpush.bf16.msra.mxu0 %v674
    %881 = vmatpush.bf16.msra.mxu0 %v673
    %882 = vmatpush.bf16.msra.mxu0 %v672
    %883 = vmatpush.bf16.msra.mxu0 %v671
    %884 = vmatpush.bf16.msra.mxu0 %v670
    %885 = vmatmul.bf16.gmra.mxu0 %v239
    %v886 = vpop.f32.mrf.mxu0
    %v887 = vadd.f32 %v874, %v886
    %v888 = vpop.f32.mrf.mxu0
    %889 = vdwg.mxu0
    %890 = vmatpush.bf16.msra.mxu0 %v685
    %891 = vmatpush.bf16.msra.mxu0 %v684
    %892 = vmatpush.bf16.msra.mxu0 %v683
    %893 = vmatpush.bf16.msra.mxu0 %v682
    %894 = vmatpush.bf16.msra.mxu0 %v681
    %895 = vmatpush.bf16.msra.mxu0 %v680
    %896 = vmatpush.bf16.msra.mxu0 %v679
    %897 = vmatpush.bf16.msra.mxu0 %v678
    %898 = vmatmul.bf16.gmra.mxu0 %v240
    %v899 = vpop.f32.mrf.mxu0
    %v900 = vadd.f32 %v887, %v899
    %v901 = vpop.f32.mrf.mxu0
    %902 = vdwg.mxu0
    %903 = vmatpush.bf16.msra.mxu0 %v693
    %904 = vmatpush.bf16.msra.mxu0 %v692
    %905 = vmatpush.bf16.msra.mxu0 %v691
    %906 = vmatpush.bf16.msra.mxu0 %v690
    %907 = vmatpush.bf16.msra.mxu0 %v689
    %908 = vmatpush.bf16.msra.mxu0 %v688
    %909 = vmatpush.bf16.msra.mxu0 %v687
    %910 = vmatpush.bf16.msra.mxu0 %v686
    %911 = vmatmul.bf16.gmra.mxu0 %v241
    %v912 = vpop.f32.mrf.mxu0
    %v913 = vadd.f32 %v900, %v912
    %v914 = vpop.f32.mrf.mxu0
    %915 = vdwg.mxu0
    %916 = vmatpush.bf16.msra.mxu0 %v701
    %917 = vmatpush.bf16.msra.mxu0 %v700
    %918 = vmatpush.bf16.msra.mxu0 %v699
    %919 = vmatpush.bf16.msra.mxu0 %v698
    %920 = vmatpush.bf16.msra.mxu0 %v697
    %921 = vmatpush.bf16.msra.mxu0 %v696
    %922 = vmatpush.bf16.msra.mxu0 %v695
    %923 = vmatpush.bf16.msra.mxu0 %v694
    %924 = vmatmul.bf16.gmra.mxu0 %v242
    %v925 = vpop.f32.mrf.mxu0
    %v926 = vadd.f32 %v913, %v925
    %v927 = vpop.f32.mrf.mxu0
    %928 = vdwg.mxu0
    %929 = vmatpush.bf16.msra.mxu0 %v709
    %930 = vmatpush.bf16.msra.mxu0 %v708
    %931 = vmatpush.bf16.msra.mxu0 %v707
    %932 = vmatpush.bf16.msra.mxu0 %v706
    %933 = vmatpush.bf16.msra.mxu0 %v705
    %934 = vmatpush.bf16.msra.mxu0 %v704
    %935 = vmatpush.bf16.msra.mxu0 %v703
    %936 = vmatpush.bf16.msra.mxu0 %v702
    %937 = vmatmul.bf16.gmra.mxu0 %v243
    %v938 = vpop.f32.mrf.mxu0
    %v939 = vadd.f32 %v926, %v938
    %v940 = vpop.f32.mrf.mxu0
    %941 = vdwg.mxu0
    %942 = vmatpush.bf16.msra.mxu0 %v717
    %943 = vmatpush.bf16.msra.mxu0 %v716
    %944 = vmatpush.bf16.msra.mxu0 %v715
    %945 = vmatpush.bf16.msra.mxu0 %v714
    %946 = vmatpush.bf16.msra.mxu0 %v713
    %947 = vmatpush.bf16.msra.mxu0 %v712
    %948 = vmatpush.bf16.msra.mxu0 %v711
    %949 = vmatpush.bf16.msra.mxu0 %v710
    %950 = vmatmul.bf16.gmra.mxu0 %v246
    %v951 = vpop.f32.mrf.mxu0
    %v952 = vadd.f32 %v939, %v951
    %v953 = vpop.f32.mrf.mxu0
    %954 = vdwg.mxu0
    %955 = vmatpush.bf16.msra.mxu0 %v725
    %956 = vmatpush.bf16.msra.mxu0 %v724
    %957 = vmatpush.bf16.msra.mxu0 %v723
    %958 = vmatpush.bf16.msra.mxu0 %v722
    %959 = vmatpush.bf16.msra.mxu0 %v721
    %960 = vmatpush.bf16.msra.mxu0 %v720
    %961 = vmatpush.bf16.msra.mxu0 %v719
    %962 = vmatpush.bf16.msra.mxu0 %v718
    %963 = vmatmul.bf16.gmra.mxu0 %v247
    %v964 = vpop.f32.mrf.mxu0
    %v965 = vadd.f32 %v952, %v964
    %v966 = vpop.f32.mrf.mxu0
    %967 = vdwg.mxu0
    %968 = vmatpush.bf16.msra.mxu0 %v733
    %969 = vmatpush.bf16.msra.mxu0 %v732
    %970 = vmatpush.bf16.msra.mxu0 %v731
    %971 = vmatpush.bf16.msra.mxu0 %v730
    %972 = vmatpush.bf16.msra.mxu0 %v729
    %973 = vmatpush.bf16.msra.mxu0 %v728
    %974 = vmatpush.bf16.msra.mxu0 %v727
    %975 = vmatpush.bf16.msra.mxu0 %v726
    %976 = vmatmul.bf16.gmra.mxu0 %v248
    %v977 = vpop.f32.mrf.mxu0
    %v978 = vadd.f32 %v965, %v977
    %v979 = vpop.f32.mrf.mxu0
    %980 = vdwg.mxu0
    %981 = vmatpush.bf16.msra.mxu0 %v741
    %982 = vmatpush.bf16.msra.mxu0 %v740
    %983 = vmatpush.bf16.msra.mxu0 %v739
    %984 = vmatpush.bf16.msra.mxu0 %v738
    %985 = vmatpush.bf16.msra.mxu0 %v737
    %986 = vmatpush.bf16.msra.mxu0 %v736
    %987 = vmatpush.bf16.msra.mxu0 %v735
    %988 = vmatpush.bf16.msra.mxu0 %v734
    %989 = vmatmul.bf16.gmra.mxu0 %v249
    %v990 = vpop.f32.mrf.mxu0
    %v991 = vadd.f32 %v978, %v990
    %v992 = vpop.f32.mrf.mxu0
    %993 = vdwg.mxu0
    %v994 = vld [vmem:[%s2] sm:$0xf]
    %v995 = vld [vmem:[%s2 + $0x4] sm:$0xf]
    %v996 = vld [vmem:[%s2 + $0x8] sm:$0xf]
    %v997 = vld [vmem:[%s2 + $0xc] sm:$0xf]
    %v998 = vld [vmem:[%s2 + $0x10] sm:$0xf]
    %v999 = vld [vmem:[%s2 + $0x14] sm:$0xf]
    %v1000 = vld [vmem:[%s2 + $0x18] sm:$0xf]
    %v1001 = vld [vmem:[%s2 + $0x1c] sm:$0xf]
    %v1002 = vld [vmem:[%s2 + $0x20] sm:$0xf]
    %v1003 = vld [vmem:[%s2 + $0x24] sm:$0xf]
    %v1004 = vld [vmem:[%s2 + $0x28] sm:$0xf]
    %v1005 = vld [vmem:[%s2 + $0x2c] sm:$0xf]
    %v1006 = vld [vmem:[%s2 + $0x30] sm:$0xf]
    %v1007 = vld [vmem:[%s2 + $0x34] sm:$0xf]
    %v1008 = vld [vmem:[%s2 + $0x38] sm:$0xf]
    %v1009 = vld [vmem:[%s2 + $0x3c] sm:$0xf]
    %v1010 = vld [vmem:[%s2 + $0x40] sm:$0xf]
    %v1011 = vld [vmem:[%s2 + $0x44] sm:$0xf]
    %v1012 = vld [vmem:[%s2 + $0x48] sm:$0xf]
    %v1013 = vld [vmem:[%s2 + $0x4c] sm:$0xf]
    %v1014 = vld [vmem:[%s2 + $0x50] sm:$0xf]
    %v1015 = vld [vmem:[%s2 + $0x54] sm:$0xf]
    %v1016 = vld [vmem:[%s2 + $0x58] sm:$0xf]
    %v1017 = vld [vmem:[%s2 + $0x5c] sm:$0xf]
    %v1018 = vld [vmem:[%s2 + $0x60] sm:$0xf]
    %v1019 = vld [vmem:[%s2 + $0x64] sm:$0xf]
    %v1020 = vld [vmem:[%s2 + $0x68] sm:$0xf]
    %v1021 = vld [vmem:[%s2 + $0x6c] sm:$0xf]
    %v1022 = vld [vmem:[%s2 + $0x70] sm:$0xf]
    %v1023 = vld [vmem:[%s2 + $0x74] sm:$0xf]
    %v1024 = vld [vmem:[%s2 + $0x78] sm:$0xf]
    %v1025 = vld [vmem:[%s2 + $0x7c] sm:$0xf]
    %v1026 = vld [vmem:[%s2 + $0x80] sm:$0xf]
    %v1027 = vld [vmem:[%s2 + $0x84] sm:$0xf]
    %v1028 = vld [vmem:[%s2 + $0x88] sm:$0xf]
    %v1029 = vld [vmem:[%s2 + $0x8c] sm:$0xf]
    %v1030 = vld [vmem:[%s2 + $0x90] sm:$0xf]
    %v1031 = vld [vmem:[%s2 + $0x94] sm:$0xf]
    %v1032 = vld [vmem:[%s2 + $0x98] sm:$0xf]
    %v1033 = vld [vmem:[%s2 + $0x9c] sm:$0xf]
    %v1034 = vld [vmem:[%s2 + $0xa0] sm:$0xf]
    %v1035 = vld [vmem:[%s2 + $0xa4] sm:$0xf]
    %v1036 = vld [vmem:[%s2 + $0xa8] sm:$0xf]
    %v1037 = vld [vmem:[%s2 + $0xac] sm:$0xf]
    %v1038 = vld [vmem:[%s2 + $0xb0] sm:$0xf]
    %v1039 = vld [vmem:[%s2 + $0xb4] sm:$0xf]
    %v1040 = vld [vmem:[%s2 + $0xb8] sm:$0xf]
    %v1041 = vld [vmem:[%s2 + $0xbc] sm:$0xf]
    %v1042 = vld [vmem:[%s2 + $0xc0] sm:$0xf]
    %v1043 = vld [vmem:[%s2 + $0xc4] sm:$0xf]
    %v1044 = vld [vmem:[%s2 + $0xc8] sm:$0xf]
    %v1045 = vld [vmem:[%s2 + $0xcc] sm:$0xf]
    %v1046 = vld [vmem:[%s2 + $0xd0] sm:$0xf]
    %v1047 = vld [vmem:[%s2 + $0xd4] sm:$0xf]
    %v1048 = vld [vmem:[%s2 + $0xd8] sm:$0xf]
    %v1049 = vld [vmem:[%s2 + $0xdc] sm:$0xf]
    %v1050 = vld [vmem:[%s2 + $0xe0] sm:$0xf]
    %v1051 = vld [vmem:[%s2 + $0xe4] sm:$0xf]
    %v1052 = vld [vmem:[%s2 + $0xe8] sm:$0xf]
    %v1053 = vld [vmem:[%s2 + $0xec] sm:$0xf]
    %v1054 = vld [vmem:[%s2 + $0xf0] sm:$0xf]
    %v1055 = vld [vmem:[%s2 + $0xf4] sm:$0xf]
    %v1056 = vld [vmem:[%s2 + $0xf8] sm:$0xf]
    %v1057 = vld [vmem:[%s2 + $0xfc] sm:$0xf]
    %v1058 = vld [vmem:[%s2 + $0x100] sm:$0xf]
    %v1059 = vld [vmem:[%s2 + $0x104] sm:$0xf]
    %v1060 = vld [vmem:[%s2 + $0x108] sm:$0xf]
    %v1061 = vld [vmem:[%s2 + $0x10c] sm:$0xf]
    %v1062 = vld [vmem:[%s2 + $0x110] sm:$0xf]
    %v1063 = vld [vmem:[%s2 + $0x114] sm:$0xf]
    %v1064 = vld [vmem:[%s2 + $0x118] sm:$0xf]
    %v1065 = vld [vmem:[%s2 + $0x11c] sm:$0xf]
    %v1066 = vld [vmem:[%s2 + $0x120] sm:$0xf]
    %v1067 = vld [vmem:[%s2 + $0x124] sm:$0xf]
    %v1068 = vld [vmem:[%s2 + $0x128] sm:$0xf]
    %v1069 = vld [vmem:[%s2 + $0x12c] sm:$0xf]
    %v1070 = vld [vmem:[%s2 + $0x130] sm:$0xf]
    %v1071 = vld [vmem:[%s2 + $0x134] sm:$0xf]
    %v1072 = vld [vmem:[%s2 + $0x138] sm:$0xf]
    %v1073 = vld [vmem:[%s2 + $0x13c] sm:$0xf]
    %v1074 = vld [vmem:[%s2 + $0x140] sm:$0xf]
    %v1075 = vld [vmem:[%s2 + $0x144] sm:$0xf]
    %v1076 = vld [vmem:[%s2 + $0x148] sm:$0xf]
    %v1077 = vld [vmem:[%s2 + $0x14c] sm:$0xf]
    %v1078 = vld [vmem:[%s2 + $0x150] sm:$0xf]
    %v1079 = vld [vmem:[%s2 + $0x154] sm:$0xf]
    %v1080 = vld [vmem:[%s2 + $0x158] sm:$0xf]
    %v1081 = vld [vmem:[%s2 + $0x15c] sm:$0xf]
    %v1082 = vld [vmem:[%s2 + $0x160] sm:$0xf]
    %v1083 = vld [vmem:[%s2 + $0x164] sm:$0xf]
    %v1084 = vld [vmem:[%s2 + $0x168] sm:$0xf]
    %v1085 = vld [vmem:[%s2 + $0x16c] sm:$0xf]
    %v1086 = vld [vmem:[%s2 + $0x170] sm:$0xf]
    %v1087 = vld [vmem:[%s2 + $0x174] sm:$0xf]
    %v1088 = vld [vmem:[%s2 + $0x178] sm:$0xf]
    %v1089 = vld [vmem:[%s2 + $0x17c] sm:$0xf]
    %v1090 = vld [vmem:[%s2 + $0x180] sm:$0xf]
    %v1091 = vld [vmem:[%s2 + $0x184] sm:$0xf]
    %v1092 = vld [vmem:[%s2 + $0x188] sm:$0xf]
    %v1093 = vld [vmem:[%s2 + $0x18c] sm:$0xf]
    %v1094 = vld [vmem:[%s2 + $0x190] sm:$0xf]
    %v1095 = vld [vmem:[%s2 + $0x194] sm:$0xf]
    %v1096 = vld [vmem:[%s2 + $0x198] sm:$0xf]
    %v1097 = vld [vmem:[%s2 + $0x19c] sm:$0xf]
    %v1098 = vld [vmem:[%s2 + $0x1a0] sm:$0xf]
    %v1099 = vld [vmem:[%s2 + $0x1a4] sm:$0xf]
    %v1100 = vld [vmem:[%s2 + $0x1a8] sm:$0xf]
    %v1101 = vld [vmem:[%s2 + $0x1ac] sm:$0xf]
    %v1102 = vld [vmem:[%s2 + $0x1b0] sm:$0xf]
    %v1103 = vld [vmem:[%s2 + $0x1b4] sm:$0xf]
    %v1104 = vld [vmem:[%s2 + $0x1b8] sm:$0xf]
    %v1105 = vld [vmem:[%s2 + $0x1bc] sm:$0xf]
    %v1106 = vld [vmem:[%s2 + $0x1c0] sm:$0xf]
    %v1107 = vld [vmem:[%s2 + $0x1c4] sm:$0xf]
    %v1108 = vld [vmem:[%s2 + $0x1c8] sm:$0xf]
    %v1109 = vld [vmem:[%s2 + $0x1cc] sm:$0xf]
    %v1110 = vld [vmem:[%s2 + $0x1d0] sm:$0xf]
    %v1111 = vld [vmem:[%s2 + $0x1d4] sm:$0xf]
    %v1112 = vld [vmem:[%s2 + $0x1d8] sm:$0xf]
    %v1113 = vld [vmem:[%s2 + $0x1dc] sm:$0xf]
    %v1114 = vld [vmem:[%s2 + $0x1e0] sm:$0xf]
    %v1115 = vld [vmem:[%s2 + $0x1e4] sm:$0xf]
    %v1116 = vld [vmem:[%s2 + $0x1e8] sm:$0xf]
    %v1117 = vld [vmem:[%s2 + $0x1ec] sm:$0xf]
    %v1118 = vld [vmem:[%s2 + $0x1f0] sm:$0xf]
    %v1119 = vld [vmem:[%s2 + $0x1f4] sm:$0xf]
    %v1120 = vld [vmem:[%s2 + $0x1f8] sm:$0xf]
    %v1121 = vld [vmem:[%s2 + $0x1fc] sm:$0xf]
    %v1122 = vld [vmem:[%s2 + $0x200] sm:$0xf]
    %v1123 = vld [vmem:[%s2 + $0x204] sm:$0xf]
    %v1124 = vld [vmem:[%s2 + $0x208] sm:$0xf]
    %v1125 = vld [vmem:[%s2 + $0x20c] sm:$0xf]
    %v1126 = vld [vmem:[%s2 + $0x210] sm:$0xf]
    %v1127 = vld [vmem:[%s2 + $0x214] sm:$0xf]
    %v1128 = vld [vmem:[%s2 + $0x218] sm:$0xf]
    %v1129 = vld [vmem:[%s2 + $0x21c] sm:$0xf]
    %v1130 = vld [vmem:[%s2 + $0x220] sm:$0xf]
    %v1131 = vld [vmem:[%s2 + $0x224] sm:$0xf]
    %v1132 = vld [vmem:[%s2 + $0x228] sm:$0xf]
    %v1133 = vld [vmem:[%s2 + $0x22c] sm:$0xf]
    %v1134 = vld [vmem:[%s2 + $0x230] sm:$0xf]
    %v1135 = vld [vmem:[%s2 + $0x234] sm:$0xf]
    %v1136 = vld [vmem:[%s2 + $0x238] sm:$0xf]
    %v1137 = vld [vmem:[%s2 + $0x23c] sm:$0xf]
    %v1138 = vld [vmem:[%s2 + $0x240] sm:$0xf]
    %v1139 = vld [vmem:[%s2 + $0x244] sm:$0xf]
    %v1140 = vld [vmem:[%s2 + $0x248] sm:$0xf]
    %v1141 = vld [vmem:[%s2 + $0x24c] sm:$0xf]
    %v1142 = vld [vmem:[%s2 + $0x250] sm:$0xf]
    %v1143 = vld [vmem:[%s2 + $0x254] sm:$0xf]
    %v1144 = vld [vmem:[%s2 + $0x258] sm:$0xf]
    %v1145 = vld [vmem:[%s2 + $0x25c] sm:$0xf]
    %v1146 = vld [vmem:[%s2 + $0x260] sm:$0xf]
    %v1147 = vld [vmem:[%s2 + $0x264] sm:$0xf]
    %v1148 = vld [vmem:[%s2 + $0x268] sm:$0xf]
    %v1149 = vld [vmem:[%s2 + $0x26c] sm:$0xf]
    %v1150 = vld [vmem:[%s2 + $0x270] sm:$0xf]
    %v1151 = vld [vmem:[%s2 + $0x274] sm:$0xf]
    %v1152 = vld [vmem:[%s2 + $0x278] sm:$0xf]
    %v1153 = vld [vmem:[%s2 + $0x27c] sm:$0xf]
    %v1154 = vld [vmem:[%s2 + $0x280] sm:$0xf]
    %v1155 = vld [vmem:[%s2 + $0x284] sm:$0xf]
    %v1156 = vld [vmem:[%s2 + $0x288] sm:$0xf]
    %v1157 = vld [vmem:[%s2 + $0x28c] sm:$0xf]
    %v1158 = vld [vmem:[%s2 + $0x290] sm:$0xf]
    %v1159 = vld [vmem:[%s2 + $0x294] sm:$0xf]
    %v1160 = vld [vmem:[%s2 + $0x298] sm:$0xf]
    %v1161 = vld [vmem:[%s2 + $0x29c] sm:$0xf]
    %v1162 = vld [vmem:[%s2 + $0x2a0] sm:$0xf]
    %v1163 = vld [vmem:[%s2 + $0x2a4] sm:$0xf]
    %v1164 = vld [vmem:[%s2 + $0x2a8] sm:$0xf]
    %v1165 = vld [vmem:[%s2 + $0x2ac] sm:$0xf]
    %v1166 = vld [vmem:[%s2 + $0x2b0] sm:$0xf]
    %v1167 = vld [vmem:[%s2 + $0x2b4] sm:$0xf]
    %v1168 = vld [vmem:[%s2 + $0x2b8] sm:$0xf]
    %v1169 = vld [vmem:[%s2 + $0x2bc] sm:$0xf]
    %v1170 = vld [vmem:[%s2 + $0x2c0] sm:$0xf]
    %v1171 = vld [vmem:[%s2 + $0x2c4] sm:$0xf]
    %v1172 = vld [vmem:[%s2 + $0x2c8] sm:$0xf]
    %v1173 = vld [vmem:[%s2 + $0x2cc] sm:$0xf]
    %v1174 = vld [vmem:[%s2 + $0x2d0] sm:$0xf]
    %v1175 = vld [vmem:[%s2 + $0x2d4] sm:$0xf]
    %v1176 = vld [vmem:[%s2 + $0x2d8] sm:$0xf]
    %v1177 = vld [vmem:[%s2 + $0x2dc] sm:$0xf]
    %v1178 = vld [vmem:[%s2 + $0x2e0] sm:$0xf]
    %v1179 = vld [vmem:[%s2 + $0x2e4] sm:$0xf]
    %v1180 = vld [vmem:[%s2 + $0x2e8] sm:$0xf]
    %v1181 = vld [vmem:[%s2 + $0x2ec] sm:$0xf]
    %v1182 = vld [vmem:[%s2 + $0x2f0] sm:$0xf]
    %v1183 = vld [vmem:[%s2 + $0x2f4] sm:$0xf]
    %v1184 = vld [vmem:[%s2 + $0x2f8] sm:$0xf]
    %v1185 = vld [vmem:[%s2 + $0x2fc] sm:$0xf]
    %v1186 = vld [vmem:[%s3] sm:$0x1]
    %v1188 = vperm.slane %v1186, 0
    %1190 = vst [vmem:[#allocation1] ss:$9 sm:$0xff] %v40
    %v1191 = vld [vmem:[#allocation1] sm:$0xff]
    %v1192 = vld [vmem:[#allocation1 + $0x9] sm:$0xff]
    %v1193 = vld [vmem:[#allocation1 + $0x12] sm:$0xff]
    %v1194 = vld [vmem:[#allocation1 + $0x1b] sm:$0xff]
    %v1195 = vld [vmem:[#allocation1 + $0x24] sm:$0xff]
    %v1196 = vld [vmem:[#allocation1 + $0x2d] sm:$0xff]
    %v1197 = vld [vmem:[#allocation1 + $0x36] sm:$0xff]
    %v1198 = vld [vmem:[#allocation1 + $0x3f] sm:$0xff]
    %1199 = vst [vmem:[#allocation1] ss:$9 sm:$0xff] %v41
    %v1200 = vld [vmem:[#allocation1] sm:$0xff]
    %v1201 = vld [vmem:[#allocation1 + $0x9] sm:$0xff]
    %v1202 = vld [vmem:[#allocation1 + $0x12] sm:$0xff]
    %v1203 = vld [vmem:[#allocation1 + $0x1b] sm:$0xff]
    %v1408 = vunpack.c.l.b16 %v994
    %v1409 = vunpack.c.l.b16 %v995
    %v1410 = vunpack.c.l.b16 %v996
    %v1411 = vunpack.c.l.b16 %v997
    %v1412 = vunpack.c.l.b16 %v998
    %v1413 = vunpack.c.l.b16 %v999
    %v1414 = vunpack.c.l.b16 %v1000
    %v1415 = vunpack.c.l.b16 %v1001
    %v1416 = vunpack.c.l.b16 %v1002
    %v1417 = vunpack.c.l.b16 %v1003
    %v1418 = vunpack.c.l.b16 %v1004
    %v1419 = vunpack.c.l.b16 %v1005
    %v1420 = vunpack.c.l.b16 %v1006
    %v1421 = vunpack.c.l.b16 %v1007
    %v1422 = vunpack.c.l.b16 %v1008
    %v1423 = vunpack.c.l.b16 %v1009
    %v1424 = vunpack.c.l.b16 %v1010
    %v1425 = vunpack.c.l.b16 %v1011
    %v1426 = vunpack.c.l.b16 %v1012
    %v1427 = vunpack.c.l.b16 %v1013
    %v1428 = vunpack.c.l.b16 %v1014
    %v1429 = vunpack.c.l.b16 %v1015
    %v1430 = vunpack.c.l.b16 %v1016
    %v1431 = vunpack.c.l.b16 %v1017
    %v1432 = vunpack.c.l.b16 %v1018
    %v1433 = vunpack.c.l.b16 %v1019
    %v1434 = vunpack.c.l.b16 %v1020
    %v1435 = vunpack.c.l.b16 %v1021
    %v1436 = vunpack.c.l.b16 %v1022
    %v1437 = vunpack.c.l.b16 %v1023
    %v1438 = vunpack.c.l.b16 %v1024
    %v1439 = vunpack.c.l.b16 %v1025
    %v1440 = vunpack.c.l.b16 %v1026
    %v1441 = vunpack.c.l.b16 %v1027
    %v1442 = vunpack.c.l.b16 %v1028
    %v1443 = vunpack.c.l.b16 %v1029
    %v1444 = vunpack.c.l.b16 %v1030
    %v1445 = vunpack.c.l.b16 %v1031
    %v1446 = vunpack.c.l.b16 %v1032
    %v1447 = vunpack.c.l.b16 %v1033
    %v1448 = vunpack.c.l.b16 %v1034
    %v1449 = vunpack.c.l.b16 %v1035
    %v1450 = vunpack.c.l.b16 %v1036
    %v1451 = vunpack.c.l.b16 %v1037
    %v1452 = vunpack.c.l.b16 %v1038
    %v1453 = vunpack.c.l.b16 %v1039
    %v1454 = vunpack.c.l.b16 %v1040
    %v1455 = vunpack.c.l.b16 %v1041
    %v1456 = vunpack.c.l.b16 %v1042
    %v1457 = vunpack.c.l.b16 %v1043
    %v1458 = vunpack.c.l.b16 %v1044
    %v1459 = vunpack.c.l.b16 %v1045
    %v1460 = vunpack.c.l.b16 %v1046
    %v1461 = vunpack.c.l.b16 %v1047
    %v1462 = vunpack.c.l.b16 %v1048
    %v1463 = vunpack.c.l.b16 %v1049
    %v1464 = vunpack.c.l.b16 %v1050
    %v1465 = vunpack.c.l.b16 %v1051
    %v1466 = vunpack.c.l.b16 %v1052
    %v1467 = vunpack.c.l.b16 %v1053
    %v1468 = vunpack.c.l.b16 %v1054
    %v1469 = vunpack.c.l.b16 %v1055
    %v1470 = vunpack.c.l.b16 %v1056
    %v1471 = vunpack.c.l.b16 %v1057
    %v1472 = vunpack.c.l.b16 %v1058
    %v1473 = vunpack.c.l.b16 %v1059
    %v1474 = vunpack.c.l.b16 %v1060
    %v1475 = vunpack.c.l.b16 %v1061
    %v1476 = vunpack.c.l.b16 %v1062
    %v1477 = vunpack.c.l.b16 %v1063
    %v1478 = vunpack.c.l.b16 %v1064
    %v1479 = vunpack.c.l.b16 %v1065
    %v1480 = vunpack.c.l.b16 %v1066
    %v1481 = vunpack.c.l.b16 %v1067
    %v1482 = vunpack.c.l.b16 %v1068
    %v1483 = vunpack.c.l.b16 %v1069
    %v1484 = vunpack.c.l.b16 %v1070
    %v1485 = vunpack.c.l.b16 %v1071
    %v1486 = vunpack.c.l.b16 %v1072
    %v1487 = vunpack.c.l.b16 %v1073
    %v1488 = vunpack.c.l.b16 %v1074
    %v1489 = vunpack.c.l.b16 %v1075
    %v1490 = vunpack.c.l.b16 %v1076
    %v1491 = vunpack.c.l.b16 %v1077
    %v1492 = vunpack.c.l.b16 %v1078
    %v1493 = vunpack.c.l.b16 %v1079
    %v1494 = vunpack.c.l.b16 %v1080
    %v1495 = vunpack.c.l.b16 %v1081
    %v1496 = vunpack.c.l.b16 %v1082
    %v1497 = vunpack.c.l.b16 %v1083
    %v1498 = vunpack.c.l.b16 %v1084
    %v1499 = vunpack.c.l.b16 %v1085
    %v1500 = vunpack.c.l.b16 %v1086
    %v1501 = vunpack.c.l.b16 %v1087
    %v1502 = vunpack.c.l.b16 %v1088
    %v1503 = vunpack.c.l.b16 %v1089
    %v1504 = vunpack.c.l.b16 %v1090
    %v1505 = vunpack.c.l.b16 %v1091
    %v1506 = vunpack.c.l.b16 %v1092
    %v1507 = vunpack.c.l.b16 %v1093
    %v1508 = vunpack.c.l.b16 %v1094
    %v1509 = vunpack.c.l.b16 %v1095
    %v1510 = vunpack.c.l.b16 %v1096
    %v1511 = vunpack.c.l.b16 %v1097
    %v1512 = vunpack.c.l.b16 %v1098
    %v1513 = vunpack.c.l.b16 %v1099
    %v1514 = vunpack.c.l.b16 %v1100
    %v1515 = vunpack.c.l.b16 %v1101
    %v1516 = vunpack.c.l.b16 %v1102
    %v1517 = vunpack.c.l.b16 %v1103
    %v1518 = vunpack.c.l.b16 %v1104
    %v1519 = vunpack.c.l.b16 %v1105
    %v1520 = vunpack.c.l.b16 %v1106
    %v1521 = vunpack.c.l.b16 %v1107
    %v1522 = vunpack.c.l.b16 %v1108
    %v1523 = vunpack.c.l.b16 %v1109
    %v1524 = vunpack.c.l.b16 %v1110
    %v1525 = vunpack.c.l.b16 %v1111
    %v1526 = vunpack.c.l.b16 %v1112
    %v1527 = vunpack.c.l.b16 %v1113
    %v1528 = vunpack.c.l.b16 %v1114
    %v1529 = vunpack.c.l.b16 %v1115
    %v1530 = vunpack.c.l.b16 %v1116
    %v1531 = vunpack.c.l.b16 %v1117
    %v1532 = vunpack.c.l.b16 %v1118
    %v1533 = vunpack.c.l.b16 %v1119
    %v1534 = vunpack.c.l.b16 %v1120
    %v1535 = vunpack.c.l.b16 %v1121
    %v1536 = vunpack.c.l.b16 %v1122
    %v1537 = vunpack.c.l.b16 %v1123
    %v1538 = vunpack.c.l.b16 %v1124
    %v1539 = vunpack.c.l.b16 %v1125
    %v1540 = vunpack.c.l.b16 %v1126
    %v1541 = vunpack.c.l.b16 %v1127
    %v1542 = vunpack.c.l.b16 %v1128
    %v1543 = vunpack.c.l.b16 %v1129
    %v1544 = vunpack.c.l.b16 %v1130
    %v1545 = vunpack.c.l.b16 %v1131
    %v1546 = vunpack.c.l.b16 %v1132
    %v1547 = vunpack.c.l.b16 %v1133
    %v1548 = vunpack.c.l.b16 %v1134
    %v1549 = vunpack.c.l.b16 %v1135
    %v1550 = vunpack.c.l.b16 %v1136
    %v1551 = vunpack.c.l.b16 %v1137
    %v1552 = vunpack.c.l.b16 %v1138
    %v1553 = vunpack.c.l.b16 %v1139
    %v1554 = vunpack.c.l.b16 %v1140
    %v1555 = vunpack.c.l.b16 %v1141
    %v1556 = vunpack.c.l.b16 %v1142
    %v1557 = vunpack.c.l.b16 %v1143
    %v1558 = vunpack.c.l.b16 %v1144
    %v1559 = vunpack.c.l.b16 %v1145
    %v1560 = vunpack.c.l.b16 %v1146
    %v1561 = vunpack.c.l.b16 %v1147
    %v1562 = vunpack.c.l.b16 %v1148
    %v1563 = vunpack.c.l.b16 %v1149
    %v1564 = vunpack.c.l.b16 %v1150
    %v1565 = vunpack.c.l.b16 %v1151
    %v1566 = vunpack.c.l.b16 %v1152
    %v1567 = vunpack.c.l.b16 %v1153
    %v1568 = vunpack.c.l.b16 %v1154
    %v1569 = vunpack.c.l.b16 %v1155
    %v1570 = vunpack.c.l.b16 %v1156
    %v1571 = vunpack.c.l.b16 %v1157
    %v1572 = vunpack.c.l.b16 %v1158
    %v1573 = vunpack.c.l.b16 %v1159
    %v1574 = vunpack.c.l.b16 %v1160
    %v1575 = vunpack.c.l.b16 %v1161
    %v1576 = vunpack.c.l.b16 %v1162
    %v1577 = vunpack.c.l.b16 %v1163
    %v1578 = vunpack.c.l.b16 %v1164
    %v1579 = vunpack.c.l.b16 %v1165
    %v1580 = vunpack.c.l.b16 %v1166
    %v1581 = vunpack.c.l.b16 %v1167
    %v1582 = vunpack.c.l.b16 %v1168
    %v1583 = vunpack.c.l.b16 %v1169
    %v1584 = vunpack.c.l.b16 %v1170
    %v1585 = vunpack.c.l.b16 %v1171
    %v1586 = vunpack.c.l.b16 %v1172
    %v1587 = vunpack.c.l.b16 %v1173
    %v1588 = vunpack.c.l.b16 %v1174
    %v1589 = vunpack.c.l.b16 %v1175
    %v1590 = vunpack.c.l.b16 %v1176
    %v1591 = vunpack.c.l.b16 %v1177
    %v1592 = vunpack.c.l.b16 %v1178
    %v1593 = vunpack.c.l.b16 %v1179
    %v1594 = vunpack.c.l.b16 %v1180
    %v1595 = vunpack.c.l.b16 %v1181
    %v1596 = vunpack.c.l.b16 %v1182
    %v1597 = vunpack.c.l.b16 %v1183
    %v1598 = vunpack.c.l.b16 %v1184
    %v1599 = vunpack.c.l.b16 %v1185
    %v1600 = vpack.c.b16 %v1409, %v1408
    %v1601 = vpack.c.b16 %v1411, %v1410
    %v1602 = vpack.c.b16 %v1413, %v1412
    %v1603 = vpack.c.b16 %v1415, %v1414
    %v1604 = vpack.c.b16 %v1417, %v1416
    %v1605 = vpack.c.b16 %v1419, %v1418
    %v1606 = vpack.c.b16 %v1421, %v1420
    %v1607 = vpack.c.b16 %v1423, %v1422
    %v1608 = vpack.c.b16 %v1425, %v1424
    %v1609 = vpack.c.b16 %v1427, %v1426
    %v1610 = vpack.c.b16 %v1429, %v1428
    %v1611 = vpack.c.b16 %v1431, %v1430
    %v1612 = vpack.c.b16 %v1433, %v1432
    %v1613 = vpack.c.b16 %v1435, %v1434
    %v1614 = vpack.c.b16 %v1437, %v1436
    %v1615 = vpack.c.b16 %v1439, %v1438
    %v1616 = vpack.c.b16 %v1441, %v1440
    %v1617 = vpack.c.b16 %v1443, %v1442
    %v1618 = vpack.c.b16 %v1445, %v1444
    %v1619 = vpack.c.b16 %v1447, %v1446
    %v1620 = vpack.c.b16 %v1449, %v1448
    %v1621 = vpack.c.b16 %v1451, %v1450
    %v1622 = vpack.c.b16 %v1453, %v1452
    %v1623 = vpack.c.b16 %v1455, %v1454
    %v1624 = vpack.c.b16 %v1457, %v1456
    %v1625 = vpack.c.b16 %v1459, %v1458
    %v1626 = vpack.c.b16 %v1461, %v1460
    %v1627 = vpack.c.b16 %v1463, %v1462
    %v1628 = vpack.c.b16 %v1465, %v1464
    %v1629 = vpack.c.b16 %v1467, %v1466
    %v1630 = vpack.c.b16 %v1469, %v1468
    %v1631 = vpack.c.b16 %v1471, %v1470
    %v1632 = vpack.c.b16 %v1473, %v1472
    %v1633 = vpack.c.b16 %v1475, %v1474
    %v1634 = vpack.c.b16 %v1477, %v1476
    %v1635 = vpack.c.b16 %v1479, %v1478
    %v1636 = vpack.c.b16 %v1481, %v1480
    %v1637 = vpack.c.b16 %v1483, %v1482
    %v1638 = vpack.c.b16 %v1485, %v1484
    %v1639 = vpack.c.b16 %v1487, %v1486
    %v1640 = vpack.c.b16 %v1489, %v1488
    %v1641 = vpack.c.b16 %v1491, %v1490
    %v1642 = vpack.c.b16 %v1493, %v1492
    %v1643 = vpack.c.b16 %v1495, %v1494
    %v1644 = vpack.c.b16 %v1497, %v1496
    %v1645 = vpack.c.b16 %v1499, %v1498
    %v1646 = vpack.c.b16 %v1501, %v1500
    %v1647 = vpack.c.b16 %v1503, %v1502
    %v1648 = vpack.c.b16 %v1505, %v1504
    %v1649 = vpack.c.b16 %v1507, %v1506
    %v1650 = vpack.c.b16 %v1509, %v1508
    %v1651 = vpack.c.b16 %v1511, %v1510
    %v1652 = vpack.c.b16 %v1513, %v1512
    %v1653 = vpack.c.b16 %v1515, %v1514
    %v1654 = vpack.c.b16 %v1517, %v1516
    %v1655 = vpack.c.b16 %v1519, %v1518
    %v1656 = vpack.c.b16 %v1521, %v1520
    %v1657 = vpack.c.b16 %v1523, %v1522
    %v1658 = vpack.c.b16 %v1525, %v1524
    %v1659 = vpack.c.b16 %v1527, %v1526
    %v1660 = vpack.c.b16 %v1529, %v1528
    %v1661 = vpack.c.b16 %v1531, %v1530
    %v1662 = vpack.c.b16 %v1533, %v1532
    %v1663 = vpack.c.b16 %v1535, %v1534
    %v1664 = vpack.c.b16 %v1537, %v1536
    %v1665 = vpack.c.b16 %v1539, %v1538
    %v1666 = vpack.c.b16 %v1541, %v1540
    %v1667 = vpack.c.b16 %v1543, %v1542
    %v1668 = vpack.c.b16 %v1545, %v1544
    %v1669 = vpack.c.b16 %v1547, %v1546
    %v1670 = vpack.c.b16 %v1549, %v1548
    %v1671 = vpack.c.b16 %v1551, %v1550
    %v1672 = vpack.c.b16 %v1553, %v1552
    %v1673 = vpack.c.b16 %v1555, %v1554
    %v1674 = vpack.c.b16 %v1557, %v1556
    %v1675 = vpack.c.b16 %v1559, %v1558
    %v1676 = vpack.c.b16 %v1561, %v1560
    %v1677 = vpack.c.b16 %v1563, %v1562
    %v1678 = vpack.c.b16 %v1565, %v1564
    %v1679 = vpack.c.b16 %v1567, %v1566
    %v1680 = vpack.c.b16 %v1569, %v1568
    %v1681 = vpack.c.b16 %v1571, %v1570
    %v1682 = vpack.c.b16 %v1573, %v1572
    %v1683 = vpack.c.b16 %v1575, %v1574
    %v1684 = vpack.c.b16 %v1577, %v1576
    %v1685 = vpack.c.b16 %v1579, %v1578
    %v1686 = vpack.c.b16 %v1581, %v1580
    %v1687 = vpack.c.b16 %v1583, %v1582
    %v1688 = vpack.c.b16 %v1585, %v1584
    %v1689 = vpack.c.b16 %v1587, %v1586
    %v1690 = vpack.c.b16 %v1589, %v1588
    %v1691 = vpack.c.b16 %v1591, %v1590
    %v1692 = vpack.c.b16 %v1593, %v1592
    %v1693 = vpack.c.b16 %v1595, %v1594
    %v1694 = vpack.c.b16 %v1597, %v1596
    %v1695 = vpack.c.b16 %v1599, %v1598
    %1792 = vmatpush.bf16.msra.mxu0 %v1607
    %1793 = vmatpush.bf16.msra.mxu0 %v1606
    %1794 = vmatpush.bf16.msra.mxu0 %v1605
    %1795 = vmatpush.bf16.msra.mxu0 %v1604
    %1796 = vmatpush.bf16.msra.mxu0 %v1603
    %1797 = vmatpush.bf16.msra.mxu0 %v1602
    %1798 = vmatpush.bf16.msra.mxu0 %v1601
    %1799 = vmatpush.bf16.msra.mxu0 %v1600
    %1800 = vmatmul.bf16.gmra.mxu0 %v1191
    %v1801 = vpop.f32.mrf.mxu0
    %v1802 = vadd.f32 %v1188, %v1801
    %v1803 = vpop.f32.mrf.mxu0
    %1804 = vdwg.mxu0
    %1805 = vmatpush.bf16.msra.mxu0 %v1615
    %1806 = vmatpush.bf16.msra.mxu0 %v1614
    %1807 = vmatpush.bf16.msra.mxu0 %v1613
    %1808 = vmatpush.bf16.msra.mxu0 %v1612
    %1809 = vmatpush.bf16.msra.mxu0 %v1611
    %1810 = vmatpush.bf16.msra.mxu0 %v1610
    %1811 = vmatpush.bf16.msra.mxu0 %v1609
    %1812 = vmatpush.bf16.msra.mxu0 %v1608
    %1813 = vmatmul.bf16.gmra.mxu0 %v1192
    %v1814 = vpop.f32.mrf.mxu0
    %v1815 = vadd.f32 %v1802, %v1814
    %v1816 = vpop.f32.mrf.mxu0
    %1817 = vdwg.mxu0
    %1818 = vmatpush.bf16.msra.mxu0 %v1623
    %1819 = vmatpush.bf16.msra.mxu0 %v1622
    %1820 = vmatpush.bf16.msra.mxu0 %v1621
    %1821 = vmatpush.bf16.msra.mxu0 %v1620
    %1822 = vmatpush.bf16.msra.mxu0 %v1619
    %1823 = vmatpush.bf16.msra.mxu0 %v1618
    %1824 = vmatpush.bf16.msra.mxu0 %v1617
    %1825 = vmatpush.bf16.msra.mxu0 %v1616
    %1826 = vmatmul.bf16.gmra.mxu0 %v1193
    %v1827 = vpop.f32.mrf.mxu0
    %v1828 = vadd.f32 %v1815, %v1827
    %v1829 = vpop.f32.mrf.mxu0
    %1830 = vdwg.mxu0
    %1831 = vmatpush.bf16.msra.mxu0 %v1631
    %1832 = vmatpush.bf16.msra.mxu0 %v1630
    %1833 = vmatpush.bf16.msra.mxu0 %v1629
    %1834 = vmatpush.bf16.msra.mxu0 %v1628
    %1835 = vmatpush.bf16.msra.mxu0 %v1627
    %1836 = vmatpush.bf16.msra.mxu0 %v1626
    %1837 = vmatpush.bf16.msra.mxu0 %v1625
    %1838 = vmatpush.bf16.msra.mxu0 %v1624
    %1839 = vmatmul.bf16.gmra.mxu0 %v1194
    %v1840 = vpop.f32.mrf.mxu0
    %v1841 = vadd.f32 %v1828, %v1840
    %v1842 = vpop.f32.mrf.mxu0
    %1843 = vdwg.mxu0
    %1844 = vmatpush.bf16.msra.mxu0 %v1639
    %1845 = vmatpush.bf16.msra.mxu0 %v1638
    %1846 = vmatpush.bf16.msra.mxu0 %v1637
    %1847 = vmatpush.bf16.msra.mxu0 %v1636
    %1848 = vmatpush.bf16.msra.mxu0 %v1635
    %1849 = vmatpush.bf16.msra.mxu0 %v1634
    %1850 = vmatpush.bf16.msra.mxu0 %v1633
    %1851 = vmatpush.bf16.msra.mxu0 %v1632
    %1852 = vmatmul.bf16.gmra.mxu0 %v1195
    %v1853 = vpop.f32.mrf.mxu0
    %v1854 = vadd.f32 %v1841, %v1853
    %v1855 = vpop.f32.mrf.mxu0
    %1856 = vdwg.mxu0
    %1857 = vmatpush.bf16.msra.mxu0 %v1647
    %1858 = vmatpush.bf16.msra.mxu0 %v1646
    %1859 = vmatpush.bf16.msra.mxu0 %v1645
    %1860 = vmatpush.bf16.msra.mxu0 %v1644
    %1861 = vmatpush.bf16.msra.mxu0 %v1643
    %1862 = vmatpush.bf16.msra.mxu0 %v1642
    %1863 = vmatpush.bf16.msra.mxu0 %v1641
    %1864 = vmatpush.bf16.msra.mxu0 %v1640
    %1865 = vmatmul.bf16.gmra.mxu0 %v1196
    %v1866 = vpop.f32.mrf.mxu0
    %v1867 = vadd.f32 %v1854, %v1866
    %v1868 = vpop.f32.mrf.mxu0
    %1869 = vdwg.mxu0
    %1870 = vmatpush.bf16.msra.mxu0 %v1655
    %1871 = vmatpush.bf16.msra.mxu0 %v1654
    %1872 = vmatpush.bf16.msra.mxu0 %v1653
    %1873 = vmatpush.bf16.msra.mxu0 %v1652
    %1874 = vmatpush.bf16.msra.mxu0 %v1651
    %1875 = vmatpush.bf16.msra.mxu0 %v1650
    %1876 = vmatpush.bf16.msra.mxu0 %v1649
    %1877 = vmatpush.bf16.msra.mxu0 %v1648
    %1878 = vmatmul.bf16.gmra.mxu0 %v1197
    %v1879 = vpop.f32.mrf.mxu0
    %v1880 = vadd.f32 %v1867, %v1879
    %v1881 = vpop.f32.mrf.mxu0
    %1882 = vdwg.mxu0
    %1883 = vmatpush.bf16.msra.mxu0 %v1663
    %1884 = vmatpush.bf16.msra.mxu0 %v1662
    %1885 = vmatpush.bf16.msra.mxu0 %v1661
    %1886 = vmatpush.bf16.msra.mxu0 %v1660
    %1887 = vmatpush.bf16.msra.mxu0 %v1659
    %1888 = vmatpush.bf16.msra.mxu0 %v1658
    %1889 = vmatpush.bf16.msra.mxu0 %v1657
    %1890 = vmatpush.bf16.msra.mxu0 %v1656
    %1891 = vmatmul.bf16.gmra.mxu0 %v1198
    %v1892 = vpop.f32.mrf.mxu0
    %v1893 = vadd.f32 %v1880, %v1892
    %v1894 = vpop.f32.mrf.mxu0
    %1895 = vdwg.mxu0
    %1896 = vmatpush.bf16.msra.mxu0 %v1671
    %1897 = vmatpush.bf16.msra.mxu0 %v1670
    %1898 = vmatpush.bf16.msra.mxu0 %v1669
    %1899 = vmatpush.bf16.msra.mxu0 %v1668
    %1900 = vmatpush.bf16.msra.mxu0 %v1667
    %1901 = vmatpush.bf16.msra.mxu0 %v1666
    %1902 = vmatpush.bf16.msra.mxu0 %v1665
    %1903 = vmatpush.bf16.msra.mxu0 %v1664
    %1904 = vmatmul.bf16.gmra.mxu0 %v1200
    %v1905 = vpop.f32.mrf.mxu0
    %v1906 = vadd.f32 %v1893, %v1905
    %v1907 = vpop.f32.mrf.mxu0
    %1908 = vdwg.mxu0
    %1909 = vmatpush.bf16.msra.mxu0 %v1679
    %1910 = vmatpush.bf16.msra.mxu0 %v1678
    %1911 = vmatpush.bf16.msra.mxu0 %v1677
    %1912 = vmatpush.bf16.msra.mxu0 %v1676
    %1913 = vmatpush.bf16.msra.mxu0 %v1675
    %1914 = vmatpush.bf16.msra.mxu0 %v1674
    %1915 = vmatpush.bf16.msra.mxu0 %v1673
    %1916 = vmatpush.bf16.msra.mxu0 %v1672
    %1917 = vmatmul.bf16.gmra.mxu0 %v1201
    %v1918 = vpop.f32.mrf.mxu0
    %v1919 = vadd.f32 %v1906, %v1918
    %v1920 = vpop.f32.mrf.mxu0
    %1921 = vdwg.mxu0
    %1922 = vmatpush.bf16.msra.mxu0 %v1687
    %1923 = vmatpush.bf16.msra.mxu0 %v1686
    %1924 = vmatpush.bf16.msra.mxu0 %v1685
    %1925 = vmatpush.bf16.msra.mxu0 %v1684
    %1926 = vmatpush.bf16.msra.mxu0 %v1683
    %1927 = vmatpush.bf16.msra.mxu0 %v1682
    %1928 = vmatpush.bf16.msra.mxu0 %v1681
    %1929 = vmatpush.bf16.msra.mxu0 %v1680
    %1930 = vmatmul.bf16.gmra.mxu0 %v1202
    %v1931 = vpop.f32.mrf.mxu0
    %v1932 = vadd.f32 %v1919, %v1931
    %v1933 = vpop.f32.mrf.mxu0
    %1934 = vdwg.mxu0
    %1935 = vmatpush.bf16.msra.mxu0 %v1695
    %1936 = vmatpush.bf16.msra.mxu0 %v1694
    %1937 = vmatpush.bf16.msra.mxu0 %v1693
    %1938 = vmatpush.bf16.msra.mxu0 %v1692
    %1939 = vmatpush.bf16.msra.mxu0 %v1691
    %1940 = vmatpush.bf16.msra.mxu0 %v1690
    %1941 = vmatpush.bf16.msra.mxu0 %v1689
    %1942 = vmatpush.bf16.msra.mxu0 %v1688
    %1943 = vmatmul.bf16.gmra.mxu0 %v1203
    %v1944 = vpop.f32.mrf.mxu0
    %v1945 = vadd.f32 %v1932, %v1944
    %v1946 = vpop.f32.mrf.mxu0
    %1947 = vdwg.mxu0
    %v1948 = vmax.f32 %v1945, 0.0
    %v1949 = vpack.c.bf16 %v991, %v991
    %v1950 = vld [vmem:[%s4] sm:$0xf]
    %v1951 = vld [vmem:[%s4 + $0x4] sm:$0xf]
    %v1952 = vld [vmem:[%s4 + $0x8] sm:$0xf]
    %v1953 = vld [vmem:[%s4 + $0xc] sm:$0xf]
    %v1954 = vld [vmem:[%s4 + $0x10] sm:$0xf]
    %v1955 = vld [vmem:[%s4 + $0x14] sm:$0xf]
    %v1956 = vld [vmem:[%s4 + $0x18] sm:$0xf]
    %v1957 = vld [vmem:[%s4 + $0x1c] sm:$0xf]
    %v1958 = vpack.c.bf16 %v1948, %v1948
    %v1959 = vld [vmem:[%s5] sm:$0xf]
    %v1960 = vld [vmem:[%s5 + $0x4] sm:$0xf]
    %v1961 = vld [vmem:[%s5 + $0x8] sm:$0xf]
    %v1962 = vld [vmem:[%s5 + $0xc] sm:$0xf]
    %v1963 = vld [vmem:[%s5 + $0x10] sm:$0xf]
    %v1964 = vld [vmem:[%s5 + $0x14] sm:$0xf]
    %v1965 = vld [vmem:[%s5 + $0x18] sm:$0xf]
    %v1966 = vld [vmem:[%s5 + $0x1c] sm:$0xf]
    %v1975 = vunpack.c.l.b16 %v1959
    %v1976 = vunpack.c.l.b16 %v1960
    %v1977 = vunpack.c.l.b16 %v1961
    %v1978 = vunpack.c.l.b16 %v1962
    %v1979 = vunpack.c.l.b16 %v1963
    %v1980 = vunpack.c.l.b16 %v1964
    %v1981 = vunpack.c.l.b16 %v1965
    %v1982 = vunpack.c.l.b16 %v1966
    %v1983 = vpack.c.b16 %v1976, %v1975
    %v1984 = vpack.c.b16 %v1978, %v1977
    %v1985 = vpack.c.b16 %v1980, %v1979
    %v1986 = vpack.c.b16 %v1982, %v1981
    %vm1991 = vcmask 523264
    %v1993 = vsel %vm1991, %v1958, 0
    %1995 = vmatpush.bf16.msra.mxu0 0
    %1996 = vmatpush.bf16.msra.mxu0 0
    %1997 = vmatpush.bf16.msra.mxu0 0
    %1998 = vmatpush.bf16.msra.mxu0 0
    %1999 = vmatpush.bf16.msra.mxu0 %v1986
    %2000 = vmatpush.bf16.msra.mxu0 %v1985
    %2001 = vmatpush.bf16.msra.mxu0 %v1984
    %2002 = vmatpush.bf16.msra.mxu0 %v1983
    %2003 = vmatmul.bf16.gmra.mxu0 %v1993
    %v2004 = vpop.f32.mrf.mxu0
    %v2005 = vadd.f32 0.0, %v2004
    %v2006 = vpop.f32.mrf.mxu0
    %2007 = vdwg.mxu0
    %v2016 = vunpack.c.l.b16 %v1950
    %v2017 = vunpack.c.l.b16 %v1951
    %v2018 = vunpack.c.l.b16 %v1952
    %v2019 = vunpack.c.l.b16 %v1953
    %v2020 = vunpack.c.l.b16 %v1954
    %v2021 = vunpack.c.l.b16 %v1955
    %v2022 = vunpack.c.l.b16 %v1956
    %v2023 = vunpack.c.l.b16 %v1957
    %v2024 = vpack.c.b16 %v2017, %v2016
    %v2025 = vpack.c.b16 %v2019, %v2018
    %v2026 = vpack.c.b16 %v2021, %v2020
    %v2027 = vpack.c.b16 %v2023, %v2022
    %v2033 = vsel %vm1991, %v1949, 0
    %2035 = vmatpush.bf16.msra.mxu0 0
    %2036 = vmatpush.bf16.msra.mxu0 0
    %2037 = vmatpush.bf16.msra.mxu0 0
    %2038 = vmatpush.bf16.msra.mxu0 0
    %2039 = vmatpush.bf16.msra.mxu0 %v2027
    %2040 = vmatpush.bf16.msra.mxu0 %v2026
    %2041 = vmatpush.bf16.msra.mxu0 %v2025
    %2042 = vmatpush.bf16.msra.mxu0 %v2024
    %2043 = vmatmul.bf16.gmra.mxu0 %v2033
    %v2044 = vpop.f32.mrf.mxu0
    %v2045 = vadd.f32 %v2005, %v2044
    %v2046 = vpop.f32.mrf.mxu0
    %2047 = vdwg.mxu0
    %v2048 = vld [vmem:[%s6] sm:$0x1]
    %v2050 = vperm.slane %v2048, 0
    %v2052 = vadd.f32 %v2045, %v2050
    %v2053 = vmax.f32 %v2052, 0.0
    %v2054 = vpack.c.bf16 %v2053, %v2053
    %v2055 = vld [vmem:[%s7] sm:$0xf]
    %v2056 = vld [vmem:[%s7 + $0x4] sm:$0xf]
    %v2057 = vld [vmem:[%s7 + $0x8] sm:$0xf]
    %v2058 = vld [vmem:[%s7 + $0xc] sm:$0xf]
    %v2059 = vld [vmem:[%s7 + $0x10] sm:$0xf]
    %v2060 = vld [vmem:[%s7 + $0x14] sm:$0xf]
    %v2061 = vld [vmem:[%s7 + $0x18] sm:$0xf]
    %v2062 = vld [vmem:[%s7 + $0x1c] sm:$0xf]
    %v2063 = vld [vmem:[%s8] sm:$0x1]
    %v2065 = vperm.slane %v2063, 0
    %v2075 = vunpack.c.l.b16 %v2055
    %v2076 = vunpack.c.l.b16 %v2056
    %v2077 = vunpack.c.l.b16 %v2057
    %v2078 = vunpack.c.l.b16 %v2058
    %v2079 = vunpack.c.l.b16 %v2059
    %v2080 = vunpack.c.l.b16 %v2060
    %v2081 = vunpack.c.l.b16 %v2061
    %v2082 = vunpack.c.l.b16 %v2062
    %v2083 = vpack.c.b16 %v2076, %v2075
    %v2084 = vpack.c.b16 %v2078, %v2077
    %v2085 = vpack.c.b16 %v2080, %v2079
    %v2086 = vpack.c.b16 %v2082, %v2081
    %v2092 = vsel %vm1991, %v2054, 0
    %2094 = vmatpush.bf16.msra.mxu0 0
    %2095 = vmatpush.bf16.msra.mxu0 0
    %2096 = vmatpush.bf16.msra.mxu0 0
    %2097 = vmatpush.bf16.msra.mxu0 0
    %2098 = vmatpush.bf16.msra.mxu0 %v2086
    %2099 = vmatpush.bf16.msra.mxu0 %v2085
    %2100 = vmatpush.bf16.msra.mxu0 %v2084
    %2101 = vmatpush.bf16.msra.mxu0 %v2083
    %2102 = vmatmul.bf16.gmra.mxu0 %v2092
    %v2103 = vpop.f32.mrf.mxu0
    %v2104 = vadd.f32 %v2065, %v2103
    %v2105 = vpop.f32.mrf.mxu0
    %2106 = vdwg.mxu0
    %v2107 = vmax.f32 %v2104, 0.0
    %v2108 = vpack.c.bf16 %v2107, %v2107
    %v2109 = vld [vmem:[%s9] sm:$0xf]
    %v2110 = vld [vmem:[%s9 + $0x4] sm:$0xf]
    %v2111 = vld [vmem:[%s9 + $0x8] sm:$0xf]
    %v2112 = vld [vmem:[%s9 + $0xc] sm:$0xf]
    %v2113 = vld [vmem:[%s10] sm:$0x1]
    %v2115 = vperm.slane %v2113, 0
    %v2121 = vunpack.c.l.b16 %v2109
    %v2122 = vunpack.c.l.b16 %v2110
    %v2123 = vunpack.c.l.b16 %v2111
    %v2124 = vunpack.c.l.b16 %v2112
    %v2125 = vpack.c.b16 %v2122, %v2121
    %v2126 = vpack.c.b16 %v2124, %v2123
    %vm2129 = vcmask 261120
    %v2131 = vsel %vm2129, %v2108, 0
    %2133 = vmatpush.bf16.msra.mxu0 0
    %2134 = vmatpush.bf16.msra.mxu0 0
    %2135 = vmatpush.bf16.msra.mxu0 0
    %2136 = vmatpush.bf16.msra.mxu0 0
    %2137 = vmatpush.bf16.msra.mxu0 0
    %2138 = vmatpush.bf16.msra.mxu0 0
    %2139 = vmatpush.bf16.msra.mxu0 %v2126
    %2140 = vmatpush.bf16.msra.mxu0 %v2125
    %2141 = vmatmul.bf16.gmra.mxu0 %v2131
    %v2142 = vpop.f32.mrf.mxu0
    %v2143 = vadd.f32 %v2115, %v2142
    %v2144 = vpop.f32.mrf.mxu0
    %2145 = vdwg.mxu0
    %vm2146 = vcmask 9216
    %2147 = vst.msk [vmem:[#allocation2] sm:$0x3] %vm2146, %v2143
    // Predicated region
    $region46: #{forward.5} parent=1 // pred_check
      _
    $region47: #{forward.5} parent=1 // pred_check_branch
      %2149 = sbr.rel (0) target = $region49
    $region48: #{forward.5} parent=1 // pred_region
      %2151 = vsyncadd [#allocation3], 0
      %s2153 = sshll.u32 [#allocation2], 4
      %s2154 = int_to_ptr.vmem [resolvable:$true] %s2153
      %s2155 = sshll.u32 %s11, 4
      %s2156 = int_to_ptr.hbm [resolvable:$true] %s2155
      %2158 = dma.vmem_to_hbm [thread:$0]  %s2154, 32, %s2156, [#allocation3]
    $region49: #{forward.5} parent=1 // pred_fallthru
      _
    // Predicated region
    $region50: #{forward.5} parent=1 // pred_check
      _
    $region51: #{forward.5} parent=1 // pred_check_branch
      %2160 = sbr.rel (0) target = $region53
    $region52: #{forward.5} parent=1 // pred_region
      %2162 = dma.done [#allocation3], 32
    $region53: #{forward.5} parent=1 // pred_fallthru
      _
    %2163 = vsyncpa [#allocation3], 1

</llo_original>
